<compile_context>
chip_gen: v5e
topology: v5e:2x2
jax: 0.10.0
libtpu: 0.0.40
codegen_flags: <defaults>
</compile_context>

<pallas_src>
import functools

import jax
import jax.numpy as jnp
from jax.experimental import pallas as pl
from jax.experimental.pallas import tpu as pltpu


def _round_up(x, m):
    return (x + m - 1) // m * m


def _pick_tn(nw_pad, hid_pad, itemsize, budget_bytes=4 << 20):
    """Largest lane-aligned (multiple of 128) vocab tile that divides nw_pad
    and keeps a single W2 tile under `budget_bytes`."""
    max_tn = max(128, (budget_bytes // (hid_pad * itemsize)) // 128 * 128)
    tn = min(nw_pad, max_tn)
    while nw_pad % tn != 0:
        tn -= 128
    return tn


def fnn_lm_kernel(words_ref,   # SMEM (B*num_hist,) int32       (scalar prefetch)
                  emb_hbm,     # HBM  (nwords, E_PAD)           (memory_space=ANY)
                  w1_ref,      # VMEM (K_PAD, HID_PAD)          resident across vocab tiles
                  b1_ref,      # VMEM (1, HID_PAD)
                  w2_ref,      # VMEM (HID_PAD, TN)             one vocab tile
                  b2_ref,      # VMEM (1, TN)
                  out_ref,     # VMEM (B_pad, TN)
                  x_buf,       # VMEM scratch (B_pad, K_PAD = num_hist*E_PAD)
                  h_buf,       # VMEM scratch (B_pad, HID_PAD)  persistent hidden acts
                  dma_sem,     # DMA semaphore (1,)
                  *, b_actual, num_hist):
    e_pad = emb_hbm.shape[1]
    b_pad, k_pad = x_buf.shape

    # Gather + layer 1 run exactly once (first vocab tile); h_buf persists
    # across the remaining tiles of the sequential ("arbitrary") grid axis.
    @pl.when(pl.program_id(0) == 0)
    def _():
        # Zero only the padded batch rows (disjoint from the DMA destinations),
        # so padded output rows are well-defined and no gather DMAs are wasted.
        if b_actual < b_pad:
            x_buf[pl.ds(b_actual, b_pad - b_actual), :] = jnp.zeros(
                (b_pad - b_actual, k_pad), x_buf.dtype)

        # Gather only the needed embedding rows straight from HBM into the
        # flattened activation buffer: destination offsets i*E_PAD are
        # lane-tile aligned, so the DMA itself performs the `.view(1, -1)`
        # flatten and no in-kernel reshape is needed.
        copies = []
        for b in range(b_actual):
            for i in range(num_hist):
                idx = words_ref[b * num_hist + i]
                cp = pltpu.make_async_copy(
                    emb_hbm.at[pl.ds(idx, 1), :],
                    x_buf.at[pl.ds(b, 1), pl.ds(i * e_pad, e_pad)],
                    dma_sem.at[0])
                cp.start()
                copies.append(cp)
        for cp in copies:
            cp.wait()

        # Layer 1: ONE (B_pad, K_PAD) @ (K_PAD, HID_PAD) MXU matmul, f32 acc.
        h_buf[...] = jnp.tanh(
            jnp.dot(x_buf[...], w1_ref[...], preferred_element_type=jnp.float32)
            + b1_ref[...]).astype(h_buf.dtype)
        # TODO(synk): nn.Dropout is identity in eval mode; training-mode dropout
        # (random mask + 1/(1-p) scaling) is intentionally not applied here.

    # Layer 2: one lane-dense vocab tile of the logits per grid step.
    out_ref[...] = (
        jnp.dot(h_buf[...], w2_ref[...], preferred_element_type=jnp.float32)
        + b2_ref[...]).astype(out_ref.dtype)


def prepare_fnn_lm_params(emb_table, w1, b1, w2, b2, num_hist,
                          param_dtype=jnp.float32):
    """One-time weight preparation (hoisted out of the forward hot path).

    PyTorch layouts:  emb (nwords, emb), W1 (hid, num_hist*emb), b1 (hid,),
                      W2 (nwords, hid), b2 (nwords,)
    Kernel layouts:   emb (nwords, E_PAD), W1 (num_hist*E_PAD, HID_PAD),
                      b1 (1, HID_PAD), W2 (HID_PAD, NW_PAD), b2 (1, NW_PAD)
    Zero padding is numerically exact (padded h lanes = tanh(0) and the
    corresponding W2 rows are zero; padded logits are sliced off).
    `param_dtype=jnp.bfloat16` halves weight VMEM/HBM traffic on v6e/v7x
    (accumulation stays f32 in-kernel)."""
    nwords, emb_size = emb_table.shape
    hid_size = w1.shape[0]
    assert w1.shape == (hid_size, num_hist * emb_size)
    assert w2.shape == (nwords, hid_size)

    e_pad = _round_up(emb_size, 128)
    hid_pad = _round_up(hid_size, 128)
    nw_pad = _round_up(nwords, 128)
    k_pad = num_hist * e_pad

    emb_p = jnp.zeros((nwords, e_pad), param_dtype)
    emb_p = emb_p.at[:, :emb_size].set(emb_table.astype(param_dtype))

    w1_t = jnp.transpose(w1).reshape(num_hist, emb_size, hid_size)
    w1_p = jnp.zeros((num_hist, e_pad, hid_pad), param_dtype)
    w1_p = w1_p.at[:, :emb_size, :hid_size].set(w1_t.astype(param_dtype))
    w1_p = w1_p.reshape(k_pad, hid_pad)

    b1_p = jnp.zeros((1, hid_pad), jnp.float32).at[0, :hid_size].set(
        b1.astype(jnp.float32))

    w2_p = jnp.zeros((hid_pad, nw_pad), param_dtype)
    w2_p = w2_p.at[:hid_size, :nwords].set(jnp.transpose(w2).astype(param_dtype))
    b2_p = jnp.zeros((1, nw_pad), jnp.float32).at[0, :nwords].set(
        b2.astype(jnp.float32))

    return {
        "emb": emb_p, "w1": w1_p, "b1": b1_p, "w2": w2_p, "b2": b2_p,
        "nwords": nwords, "num_hist": num_hist,
        "e_pad": e_pad, "hid_pad": hid_pad, "nw_pad": nw_pad, "k_pad": k_pad,
    }


def fnn_lm_forward(words, params):
    """words: (num_hist,) int ids (original module) or (B, num_hist) batched.
    Returns float32 logits of shape (1, nwords) / (B, nwords)."""
    words2 = words[None, :] if words.ndim == 1 else words
    B, num_hist = words2.shape
    assert num_hist == params["num_hist"]

    nwords = params["nwords"]
    e_pad, hid_pad = params["e_pad"], params["hid_pad"]
    nw_pad, k_pad = params["nw_pad"], params["k_pad"]
    param_dtype = params["w1"].dtype
    itemsize = jnp.dtype(param_dtype).itemsize

    # Pad batch to a sublane multiple for dense (8, 128) output tiles; clamp
    # ids so an out-of-range id can never trigger a silent OOB HBM read.
    b_pad = _round_up(max(B, 8), 8)
    words_flat = jnp.clip(words2.astype(jnp.int32), 0, nwords - 1).reshape(-1)

    tn = _pick_tn(nw_pad, hid_pad, itemsize)
    n_tiles = nw_pad // tn

    kernel = functools.partial(fnn_lm_kernel, b_actual=B, num_hist=num_hist)

    grid_spec = pltpu.PrefetchScalarGridSpec(
        num_scalar_prefetch=1,
        grid=(n_tiles,),
        in_specs=[
            pl.BlockSpec(memory_space=pl.ANY),                     # emb stays in HBM
            pl.BlockSpec((k_pad, hid_pad), lambda j, w: (0, 0)),   # W1 resident
            pl.BlockSpec((1, hid_pad), lambda j, w: (0, 0)),       # b1
            pl.BlockSpec((hid_pad, tn), lambda j, w: (0, j)),      # W2 vocab tile
            pl.BlockSpec((1, tn), lambda j, w: (0, j)),            # b2 vocab tile
        ],
        out_specs=pl.BlockSpec((b_pad, tn), lambda j, w: (0, j)),
        scratch_shapes=[
            pltpu.VMEM((b_pad, k_pad), param_dtype),               # flattened emb
            pltpu.VMEM((b_pad, hid_pad), param_dtype),             # hidden acts
            pltpu.SemaphoreType.DMA((1,)),
        ],
    )

    # Advisory cost: layer 1 runs once, layer 2 once per vocab tile.
    cost = pl.CostEstimate(
        flops=2 * b_pad * (k_pad * hid_pad + hid_pad * nw_pad),
        transcendentals=b_pad * hid_pad,
        bytes_accessed=((params["w1"].size + params["w2"].size) * itemsize
                        + B * num_hist * e_pad * itemsize
                        + b_pad * nw_pad * 4),
    )

    # Derive a VMEM budget from the actual tile sizes (double-buffered W2/b2/out
    # tiles + resident W1/b1 + scratch), with headroom; cap at v7x's 64 MiB.
    vmem_est = (2 * (k_pad * hid_pad + hid_pad) * itemsize
                + 2 * (hid_pad * tn * itemsize + tn * 4)
                + 2 * b_pad * tn * 4
                + b_pad * (k_pad + hid_pad) * itemsize)
    vmem_limit = int(min(64 << 20, max(16 << 20, 2 * vmem_est)))

    out = pl.pallas_call(
        kernel,
        out_shape=jax.ShapeDtypeStruct((b_pad, nw_pad), jnp.float32),
        grid_spec=grid_spec,
        compiler_params=pltpu.CompilerParams(
            # Hidden activations carry across vocab tiles -> sequential axis.
            dimension_semantics=("arbitrary",),
            vmem_limit_bytes=vmem_limit,
        ),
        cost_estimate=cost,
    )(words_flat, params["emb"], params["w1"], params["b1"],
      params["w2"], params["b2"])

    return out[:B, :nwords]


def fnn_lm_reference(words, emb_table, w1, b1, w2, b2):
    x = emb_table[words].reshape(1, -1)
    h = jnp.tanh(x @ w1.T + b1)
    return h @ w2.T + b2


if __name__ == "__main__":
    # Small deterministic configuration consistent with FNN_LM.__init__.
    nwords, emb_size, hid_size, num_hist = 1000, 32, 64, 8

    key = jax.random.PRNGKey(0)
    k_emb, k_w1, k_b1, k_w2, k_b2, k_words, k_batch = jax.random.split(key, 7)

    emb_table = jax.random.normal(k_emb, (nwords, emb_size), jnp.float32)
    lim1 = 1.0 / (num_hist * emb_size) ** 0.5
    w1 = jax.random.uniform(k_w1, (hid_size, num_hist * emb_size),
                            jnp.float32, -lim1, lim1)
    b1 = jax.random.uniform(k_b1, (hid_size,), jnp.float32, -lim1, lim1)
    lim2 = 1.0 / hid_size ** 0.5
    w2 = jax.random.uniform(k_w2, (nwords, hid_size), jnp.float32, -lim2, lim2)
    b2 = jax.random.uniform(k_b2, (nwords,), jnp.float32, -lim2, lim2)

    # One-time weight preparation (transposes/padding hoisted off the hot path).
    params = prepare_fnn_lm_params(emb_table, w1, b1, w2, b2, num_hist)

    # --- original module semantics: one context -> (1, nwords) logits ---
    words = jax.random.randint(k_words, (num_hist,), 0, nwords, jnp.int32)
    logits = jax.block_until_ready(fnn_lm_forward(words, params))
    ref = fnn_lm_reference(words, emb_table, w1, b1, w2, b2)
    assert logits.shape == (1, nwords)
    assert jnp.allclose(logits, ref, atol=1e-3, rtol=1e-3), "single-context mismatch"

    # --- batched path: several contexts per pallas_call (same kernel) ---
    words_b = jax.random.randint(k_batch, (4, num_hist), 0, nwords, jnp.int32)
    logits_b = jax.block_until_ready(fnn_lm_forward(words_b, params))
    ref_b = jnp.concatenate(
        [fnn_lm_reference(words_b[i], emb_table, w1, b1, w2, b2)
         for i in range(words_b.shape[0])], axis=0)
    assert logits_b.shape == (4, nwords)
    assert jnp.allclose(logits_b, ref_b, atol=1e-3, rtol=1e-3), "batched mismatch"

    print("KERNEL_OK")
</pallas_src>

<mosaic_0001>
module attributes {stable_mosaic.version = 11 : i64} {
  func.func @fnn_lm_kernel(%arg0: i32, %arg1: memref<8xi32, #tpu.memory_space<smem>>, %arg2: memref<1000x128xf32, #tpu.memory_space<any>>, %arg3: memref<1024x128xf32, #tpu.memory_space<vmem>>, %arg4: memref<1x128xf32, #tpu.memory_space<vmem>>, %arg5: memref<128x1024xf32, #tpu.memory_space<vmem>>, %arg6: memref<1x1024xf32, #tpu.memory_space<vmem>>, %arg7: memref<8x1024xf32, #tpu.memory_space<vmem>>, %arg8: memref<8x1024xf32, #tpu.memory_space<vmem>>, %arg9: memref<8x128xf32, #tpu.memory_space<vmem>>, %arg10: memref<1x!tpu.dma_semaphore, #tpu.memory_space<semaphore_mem>>) attributes {dimension_semantics = [#tpu.dimension_semantics<arbitrary>], iteration_bounds = array<i64: 1>, scalar_prefetch = 1 : i64, scratch_operands = 3 : i64, tpu.core_type = #tpu.core_type<tc>, window_params = [{}, {pipeline_mode = #tpu.pipeline_mode<synchronous>, transform_indices = @transform_1, window_bounds = array<i64: 1024, 128>}, {pipeline_mode = #tpu.pipeline_mode<synchronous>, transform_indices = @transform_2, window_bounds = array<i64: 1, 128>}, {transform_indices = @transform_3, window_bounds = array<i64: 128, 1024>}, {transform_indices = @transform_4, window_bounds = array<i64: 1, 1024>}, {transform_indices = @transform_5, window_bounds = array<i64: 8, 1024>}]} {
    %c0_i32 = arith.constant 0 : i32
    %0 = arith.cmpi eq, %arg0, %c0_i32 : i32
    %1 = arith.extui %0 : i1 to i32
    %c0_i32_0 = arith.constant 0 : i32
    %2 = arith.cmpi ne, %1, %c0_i32_0 : i32
    scf.if %2 {
      %cst_8 = arith.constant 0.000000e+00 : f32
      %10 = vector.broadcast %cst_8 : f32 to vector<7x1024xf32>
      %c1 = arith.constant 1 : index
      %c0_9 = arith.constant 0 : index
      %11 = vector.load %arg8[%c1, %c0_9] : memref<8x1024xf32, #tpu.memory_space<vmem>>, vector<7x1024xf32>
      tpu.vector_store %arg8[%c1, %c0_9], %10 {strides = array<i32>} : memref<8x1024xf32, #tpu.memory_space<vmem>>, vector<7x1024xf32>,
      %c0_10 = arith.constant 0 : index
      %12 = memref.load %arg1[%c0_10] : memref<8xi32, #tpu.memory_space<smem>>
      %c0_i32_11 = arith.constant 0 : i32
      %c0_i32_12 = arith.constant 0 : i32
      %13 = tpu.memref_slice %arg2[%12, %c0_i32_12] : memref<1000x128xf32, #tpu.memory_space<any>> -> memref<1x128xf32, #tpu.memory_space<any>>
      %c0_i32_13 = arith.constant 0 : i32
      %c0_i32_14 = arith.constant 0 : i32
      %14 = tpu.memref_slice %arg8[%c0_i32_13, %c0_i32_14] : memref<8x1024xf32, #tpu.memory_space<vmem>> -> memref<1x128xf32, #tpu.memory_space<vmem>>
      %15 = tpu.memref_slice %arg10[%c0_i32_11] : memref<1x!tpu.dma_semaphore, #tpu.memory_space<semaphore_mem>> -> memref<1x!tpu.dma_semaphore, #tpu.memory_space<semaphore_mem>>
      %16 = tpu.memref_squeeze %15 : memref<1x!tpu.dma_semaphore, #tpu.memory_space<semaphore_mem>> -> memref<!tpu.dma_semaphore, #tpu.memory_space<semaphore_mem>>
      tpu.enqueue_dma source(%13 : memref<1x128xf32, #tpu.memory_space<any>>) target(%14 : memref<1x128xf32, #tpu.memory_space<vmem>>) target_semaphore(%16 : memref<!tpu.dma_semaphore, #tpu.memory_space<semaphore_mem>>)
      %c1_15 = arith.constant 1 : index
      %17 = memref.load %arg1[%c1_15] : memref<8xi32, #tpu.memory_space<smem>>
      %c0_i32_16 = arith.constant 0 : i32
      %c0_i32_17 = arith.constant 0 : i32
      %18 = tpu.memref_slice %arg2[%17, %c0_i32_17] : memref<1000x128xf32, #tpu.memory_space<any>> -> memref<1x128xf32, #tpu.memory_space<any>>
      %c0_i32_18 = arith.constant 0 : i32
      %c128_i32 = arith.constant 128 : i32
      %19 = tpu.memref_slice %arg8[%c0_i32_18, %c128_i32] : memref<8x1024xf32, #tpu.memory_space<vmem>> -> memref<1x128xf32, #tpu.memory_space<vmem>>
      %20 = tpu.memref_slice %arg10[%c0_i32_16] : memref<1x!tpu.dma_semaphore, #tpu.memory_space<semaphore_mem>> -> memref<1x!tpu.dma_semaphore, #tpu.memory_space<semaphore_mem>>
      %21 = tpu.memref_squeeze %20 : memref<1x!tpu.dma_semaphore, #tpu.memory_space<semaphore_mem>> -> memref<!tpu.dma_semaphore, #tpu.memory_space<semaphore_mem>>
      tpu.enqueue_dma source(%18 : memref<1x128xf32, #tpu.memory_space<any>>) target(%19 : memref<1x128xf32, #tpu.memory_space<vmem>>) target_semaphore(%21 : memref<!tpu.dma_semaphore, #tpu.memory_space<semaphore_mem>>)
      %c2 = arith.constant 2 : index
      %22 = memref.load %arg1[%c2] : memref<8xi32, #tpu.memory_space<smem>>
      %c0_i32_19 = arith.constant 0 : i32
      %c0_i32_20 = arith.constant 0 : i32
      %23 = tpu.memref_slice %arg2[%22, %c0_i32_20] : memref<1000x128xf32, #tpu.memory_space<any>> -> memref<1x128xf32, #tpu.memory_space<any>>
      %c0_i32_21 = arith.constant 0 : i32
      %c256_i32 = arith.constant 256 : i32
      %24 = tpu.memref_slice %arg8[%c0_i32_21, %c256_i32] : memref<8x1024xf32, #tpu.memory_space<vmem>> -> memref<1x128xf32, #tpu.memory_space<vmem>>
      %25 = tpu.memref_slice %arg10[%c0_i32_19] : memref<1x!tpu.dma_semaphore, #tpu.memory_space<semaphore_mem>> -> memref<1x!tpu.dma_semaphore, #tpu.memory_space<semaphore_mem>>
      %26 = tpu.memref_squeeze %25 : memref<1x!tpu.dma_semaphore, #tpu.memory_space<semaphore_mem>> -> memref<!tpu.dma_semaphore, #tpu.memory_space<semaphore_mem>>
      tpu.enqueue_dma source(%23 : memref<1x128xf32, #tpu.memory_space<any>>) target(%24 : memref<1x128xf32, #tpu.memory_space<vmem>>) target_semaphore(%26 : memref<!tpu.dma_semaphore, #tpu.memory_space<semaphore_mem>>)
      %c3 = arith.constant 3 : index
      %27 = memref.load %arg1[%c3] : memref<8xi32, #tpu.memory_space<smem>>
      %c0_i32_22 = arith.constant 0 : i32
      %c0_i32_23 = arith.constant 0 : i32
      %28 = tpu.memref_slice %arg2[%27, %c0_i32_23] : memref<1000x128xf32, #tpu.memory_space<any>> -> memref<1x128xf32, #tpu.memory_space<any>>
      %c0_i32_24 = arith.constant 0 : i32
      %c384_i32 = arith.constant 384 : i32
      %29 = tpu.memref_slice %arg8[%c0_i32_24, %c384_i32] : memref<8x1024xf32, #tpu.memory_space<vmem>> -> memref<1x128xf32, #tpu.memory_space<vmem>>
      %30 = tpu.memref_slice %arg10[%c0_i32_22] : memref<1x!tpu.dma_semaphore, #tpu.memory_space<semaphore_mem>> -> memref<1x!tpu.dma_semaphore, #tpu.memory_space<semaphore_mem>>
      %31 = tpu.memref_squeeze %30 : memref<1x!tpu.dma_semaphore, #tpu.memory_space<semaphore_mem>> -> memref<!tpu.dma_semaphore, #tpu.memory_space<semaphore_mem>>
      tpu.enqueue_dma source(%28 : memref<1x128xf32, #tpu.memory_space<any>>) target(%29 : memref<1x128xf32, #tpu.memory_space<vmem>>) target_semaphore(%31 : memref<!tpu.dma_semaphore, #tpu.memory_space<semaphore_mem>>)
      %c4 = arith.constant 4 : index
      %32 = memref.load %arg1[%c4] : memref<8xi32, #tpu.memory_space<smem>>
      %c0_i32_25 = arith.constant 0 : i32
      %c0_i32_26 = arith.constant 0 : i32
      %33 = tpu.memref_slice %arg2[%32, %c0_i32_26] : memref<1000x128xf32, #tpu.memory_space<any>> -> memref<1x128xf32, #tpu.memory_space<any>>
      %c0_i32_27 = arith.constant 0 : i32
      %c512_i32 = arith.constant 512 : i32
      %34 = tpu.memref_slice %arg8[%c0_i32_27, %c512_i32] : memref<8x1024xf32, #tpu.memory_space<vmem>> -> memref<1x128xf32, #tpu.memory_space<vmem>>
      %35 = tpu.memref_slice %arg10[%c0_i32_25] : memref<1x!tpu.dma_semaphore, #tpu.memory_space<semaphore_mem>> -> memref<1x!tpu.dma_semaphore, #tpu.memory_space<semaphore_mem>>
      %36 = tpu.memref_squeeze %35 : memref<1x!tpu.dma_semaphore, #tpu.memory_space<semaphore_mem>> -> memref<!tpu.dma_semaphore, #tpu.memory_space<semaphore_mem>>
      tpu.enqueue_dma source(%33 : memref<1x128xf32, #tpu.memory_space<any>>) target(%34 : memref<1x128xf32, #tpu.memory_space<vmem>>) target_semaphore(%36 : memref<!tpu.dma_semaphore, #tpu.memory_space<semaphore_mem>>)
      %c5 = arith.constant 5 : index
      %37 = memref.load %arg1[%c5] : memref<8xi32, #tpu.memory_space<smem>>
      %c0_i32_28 = arith.constant 0 : i32
      %c0_i32_29 = arith.constant 0 : i32
      %38 = tpu.memref_slice %arg2[%37, %c0_i32_29] : memref<1000x128xf32, #tpu.memory_space<any>> -> memref<1x128xf32, #tpu.memory_space<any>>
      %c0_i32_30 = arith.constant 0 : i32
      %c640_i32 = arith.constant 640 : i32
      %39 = tpu.memref_slice %arg8[%c0_i32_30, %c640_i32] : memref<8x1024xf32, #tpu.memory_space<vmem>> -> memref<1x128xf32, #tpu.memory_space<vmem>>
      %40 = tpu.memref_slice %arg10[%c0_i32_28] : memref<1x!tpu.dma_semaphore, #tpu.memory_space<semaphore_mem>> -> memref<1x!tpu.dma_semaphore, #tpu.memory_space<semaphore_mem>>
      %41 = tpu.memref_squeeze %40 : memref<1x!tpu.dma_semaphore, #tpu.memory_space<semaphore_mem>> -> memref<!tpu.dma_semaphore, #tpu.memory_space<semaphore_mem>>
      tpu.enqueue_dma source(%38 : memref<1x128xf32, #tpu.memory_space<any>>) target(%39 : memref<1x128xf32, #tpu.memory_space<vmem>>) target_semaphore(%41 : memref<!tpu.dma_semaphore, #tpu.memory_space<semaphore_mem>>)
      %c6 = arith.constant 6 : index
      %42 = memref.load %arg1[%c6] : memref<8xi32, #tpu.memory_space<smem>>
      %c0_i32_31 = arith.constant 0 : i32
      %c0_i32_32 = arith.constant 0 : i32
      %43 = tpu.memref_slice %arg2[%42, %c0_i32_32] : memref<1000x128xf32, #tpu.memory_space<any>> -> memref<1x128xf32, #tpu.memory_space<any>>
      %c0_i32_33 = arith.constant 0 : i32
      %c768_i32 = arith.constant 768 : i32
      %44 = tpu.memref_slice %arg8[%c0_i32_33, %c768_i32] : memref<8x1024xf32, #tpu.memory_space<vmem>> -> memref<1x128xf32, #tpu.memory_space<vmem>>
      %45 = tpu.memref_slice %arg10[%c0_i32_31] : memref<1x!tpu.dma_semaphore, #tpu.memory_space<semaphore_mem>> -> memref<1x!tpu.dma_semaphore, #tpu.memory_space<semaphore_mem>>
      %46 = tpu.memref_squeeze %45 : memref<1x!tpu.dma_semaphore, #tpu.memory_space<semaphore_mem>> -> memref<!tpu.dma_semaphore, #tpu.memory_space<semaphore_mem>>
      tpu.enqueue_dma source(%43 : memref<1x128xf32, #tpu.memory_space<any>>) target(%44 : memref<1x128xf32, #tpu.memory_space<vmem>>) target_semaphore(%46 : memref<!tpu.dma_semaphore, #tpu.memory_space<semaphore_mem>>)
      %c7 = arith.constant 7 : index
      %47 = memref.load %arg1[%c7] : memref<8xi32, #tpu.memory_space<smem>>
      %c0_i32_34 = arith.constant 0 : i32
      %c0_i32_35 = arith.constant 0 : i32
      %48 = tpu.memref_slice %arg2[%47, %c0_i32_35] : memref<1000x128xf32, #tpu.memory_space<any>> -> memref<1x128xf32, #tpu.memory_space<any>>
      %c0_i32_36 = arith.constant 0 : i32
      %c896_i32 = arith.constant 896 : i32
      %49 = tpu.memref_slice %arg8[%c0_i32_36, %c896_i32] : memref<8x1024xf32, #tpu.memory_space<vmem>> -> memref<1x128xf32, #tpu.memory_space<vmem>>
      %50 = tpu.memref_slice %arg10[%c0_i32_34] : memref<1x!tpu.dma_semaphore, #tpu.memory_space<semaphore_mem>> -> memref<1x!tpu.dma_semaphore, #tpu.memory_space<semaphore_mem>>
      %51 = tpu.memref_squeeze %50 : memref<1x!tpu.dma_semaphore, #tpu.memory_space<semaphore_mem>> -> memref<!tpu.dma_semaphore, #tpu.memory_space<semaphore_mem>>
      tpu.enqueue_dma source(%48 : memref<1x128xf32, #tpu.memory_space<any>>) target(%49 : memref<1x128xf32, #tpu.memory_space<vmem>>) target_semaphore(%51 : memref<!tpu.dma_semaphore, #tpu.memory_space<semaphore_mem>>)
      %c0_i32_37 = arith.constant 0 : i32
      %c0_i32_38 = arith.constant 0 : i32
      %52 = tpu.memref_slice %arg2[%12, %c0_i32_38] : memref<1000x128xf32, #tpu.memory_space<any>> -> memref<1x128xf32, #tpu.memory_space<any>>
      %c0_i32_39 = arith.constant 0 : i32
      %c0_i32_40 = arith.constant 0 : i32
      %53 = tpu.memref_slice %arg8[%c0_i32_39, %c0_i32_40] : memref<8x1024xf32, #tpu.memory_space<vmem>> -> memref<1x128xf32, #tpu.memory_space<vmem>>
      %54 = tpu.memref_slice %arg10[%c0_i32_37] : memref<1x!tpu.dma_semaphore, #tpu.memory_space<semaphore_mem>> -> memref<1x!tpu.dma_semaphore, #tpu.memory_space<semaphore_mem>>
      %55 = tpu.memref_squeeze %54 : memref<1x!tpu.dma_semaphore, #tpu.memory_space<semaphore_mem>> -> memref<!tpu.dma_semaphore, #tpu.memory_space<semaphore_mem>>
      tpu.wait_dma2 semaphore(%55 : memref<!tpu.dma_semaphore, #tpu.memory_space<semaphore_mem>>) src(%52 : memref<1x128xf32, #tpu.memory_space<any>>) dst(%53 : memref<1x128xf32, #tpu.memory_space<vmem>>)
      %c0_i32_41 = arith.constant 0 : i32
      %c0_i32_42 = arith.constant 0 : i32
      %56 = tpu.memref_slice %arg2[%17, %c0_i32_42] : memref<1000x128xf32, #tpu.memory_space<any>> -> memref<1x128xf32, #tpu.memory_space<any>>
      %c0_i32_43 = arith.constant 0 : i32
      %c128_i32_44 = arith.constant 128 : i32
      %57 = tpu.memref_slice %arg8[%c0_i32_43, %c128_i32_44] : memref<8x1024xf32, #tpu.memory_space<vmem>> -> memref<1x128xf32, #tpu.memory_space<vmem>>
      %58 = tpu.memref_slice %arg10[%c0_i32_41] : memref<1x!tpu.dma_semaphore, #tpu.memory_space<semaphore_mem>> -> memref<1x!tpu.dma_semaphore, #tpu.memory_space<semaphore_mem>>
      %59 = tpu.memref_squeeze %58 : memref<1x!tpu.dma_semaphore, #tpu.memory_space<semaphore_mem>> -> memref<!tpu.dma_semaphore, #tpu.memory_space<semaphore_mem>>
      tpu.wait_dma2 semaphore(%59 : memref<!tpu.dma_semaphore, #tpu.memory_space<semaphore_mem>>) src(%56 : memref<1x128xf32, #tpu.memory_space<any>>) dst(%57 : memref<1x128xf32, #tpu.memory_space<vmem>>)
      %c0_i32_45 = arith.constant 0 : i32
      %c0_i32_46 = arith.constant 0 : i32
      %60 = tpu.memref_slice %arg2[%22, %c0_i32_46] : memref<1000x128xf32, #tpu.memory_space<any>> -> memref<1x128xf32, #tpu.memory_space<any>>
      %c0_i32_47 = arith.constant 0 : i32
      %c256_i32_48 = arith.constant 256 : i32
      %61 = tpu.memref_slice %arg8[%c0_i32_47, %c256_i32_48] : memref<8x1024xf32, #tpu.memory_space<vmem>> -> memref<1x128xf32, #tpu.memory_space<vmem>>
      %62 = tpu.memref_slice %arg10[%c0_i32_45] : memref<1x!tpu.dma_semaphore, #tpu.memory_space<semaphore_mem>> -> memref<1x!tpu.dma_semaphore, #tpu.memory_space<semaphore_mem>>
      %63 = tpu.memref_squeeze %62 : memref<1x!tpu.dma_semaphore, #tpu.memory_space<semaphore_mem>> -> memref<!tpu.dma_semaphore, #tpu.memory_space<semaphore_mem>>
      tpu.wait_dma2 semaphore(%63 : memref<!tpu.dma_semaphore, #tpu.memory_space<semaphore_mem>>) src(%60 : memref<1x128xf32, #tpu.memory_space<any>>) dst(%61 : memref<1x128xf32, #tpu.memory_space<vmem>>)
      %c0_i32_49 = arith.constant 0 : i32
      %c0_i32_50 = arith.constant 0 : i32
      %64 = tpu.memref_slice %arg2[%27, %c0_i32_50] : memref<1000x128xf32, #tpu.memory_space<any>> -> memref<1x128xf32, #tpu.memory_space<any>>
      %c0_i32_51 = arith.constant 0 : i32
      %c384_i32_52 = arith.constant 384 : i32
      %65 = tpu.memref_slice %arg8[%c0_i32_51, %c384_i32_52] : memref<8x1024xf32, #tpu.memory_space<vmem>> -> memref<1x128xf32, #tpu.memory_space<vmem>>
      %66 = tpu.memref_slice %arg10[%c0_i32_49] : memref<1x!tpu.dma_semaphore, #tpu.memory_space<semaphore_mem>> -> memref<1x!tpu.dma_semaphore, #tpu.memory_space<semaphore_mem>>
      %67 = tpu.memref_squeeze %66 : memref<1x!tpu.dma_semaphore, #tpu.memory_space<semaphore_mem>> -> memref<!tpu.dma_semaphore, #tpu.memory_space<semaphore_mem>>
      tpu.wait_dma2 semaphore(%67 : memref<!tpu.dma_semaphore, #tpu.memory_space<semaphore_mem>>) src(%64 : memref<1x128xf32, #tpu.memory_space<any>>) dst(%65 : memref<1x128xf32, #tpu.memory_space<vmem>>)
      %c0_i32_53 = arith.constant 0 : i32
      %c0_i32_54 = arith.constant 0 : i32
      %68 = tpu.memref_slice %arg2[%32, %c0_i32_54] : memref<1000x128xf32, #tpu.memory_space<any>> -> memref<1x128xf32, #tpu.memory_space<any>>
      %c0_i32_55 = arith.constant 0 : i32
      %c512_i32_56 = arith.constant 512 : i32
      %69 = tpu.memref_slice %arg8[%c0_i32_55, %c512_i32_56] : memref<8x1024xf32, #tpu.memory_space<vmem>> -> memref<1x128xf32, #tpu.memory_space<vmem>>
      %70 = tpu.memref_slice %arg10[%c0_i32_53] : memref<1x!tpu.dma_semaphore, #tpu.memory_space<semaphore_mem>> -> memref<1x!tpu.dma_semaphore, #tpu.memory_space<semaphore_mem>>
      %71 = tpu.memref_squeeze %70 : memref<1x!tpu.dma_semaphore, #tpu.memory_space<semaphore_mem>> -> memref<!tpu.dma_semaphore, #tpu.memory_space<semaphore_mem>>
      tpu.wait_dma2 semaphore(%71 : memref<!tpu.dma_semaphore, #tpu.memory_space<semaphore_mem>>) src(%68 : memref<1x128xf32, #tpu.memory_space<any>>) dst(%69 : memref<1x128xf32, #tpu.memory_space<vmem>>)
      %c0_i32_57 = arith.constant 0 : i32
      %c0_i32_58 = arith.constant 0 : i32
      %72 = tpu.memref_slice %arg2[%37, %c0_i32_58] : memref<1000x128xf32, #tpu.memory_space<any>> -> memref<1x128xf32, #tpu.memory_space<any>>
      %c0_i32_59 = arith.constant 0 : i32
      %c640_i32_60 = arith.constant 640 : i32
      %73 = tpu.memref_slice %arg8[%c0_i32_59, %c640_i32_60] : memref<8x1024xf32, #tpu.memory_space<vmem>> -> memref<1x128xf32, #tpu.memory_space<vmem>>
      %74 = tpu.memref_slice %arg10[%c0_i32_57] : memref<1x!tpu.dma_semaphore, #tpu.memory_space<semaphore_mem>> -> memref<1x!tpu.dma_semaphore, #tpu.memory_space<semaphore_mem>>
      %75 = tpu.memref_squeeze %74 : memref<1x!tpu.dma_semaphore, #tpu.memory_space<semaphore_mem>> -> memref<!tpu.dma_semaphore, #tpu.memory_space<semaphore_mem>>
      tpu.wait_dma2 semaphore(%75 : memref<!tpu.dma_semaphore, #tpu.memory_space<semaphore_mem>>) src(%72 : memref<1x128xf32, #tpu.memory_space<any>>) dst(%73 : memref<1x128xf32, #tpu.memory_space<vmem>>)
      %c0_i32_61 = arith.constant 0 : i32
      %c0_i32_62 = arith.constant 0 : i32
      %76 = tpu.memref_slice %arg2[%42, %c0_i32_62] : memref<1000x128xf32, #tpu.memory_space<any>> -> memref<1x128xf32, #tpu.memory_space<any>>
      %c0_i32_63 = arith.constant 0 : i32
      %c768_i32_64 = arith.constant 768 : i32
      %77 = tpu.memref_slice %arg8[%c0_i32_63, %c768_i32_64] : memref<8x1024xf32, #tpu.memory_space<vmem>> -> memref<1x128xf32, #tpu.memory_space<vmem>>
      %78 = tpu.memref_slice %arg10[%c0_i32_61] : memref<1x!tpu.dma_semaphore, #tpu.memory_space<semaphore_mem>> -> memref<1x!tpu.dma_semaphore, #tpu.memory_space<semaphore_mem>>
      %79 = tpu.memref_squeeze %78 : memref<1x!tpu.dma_semaphore, #tpu.memory_space<semaphore_mem>> -> memref<!tpu.dma_semaphore, #tpu.memory_space<semaphore_mem>>
      tpu.wait_dma2 semaphore(%79 : memref<!tpu.dma_semaphore, #tpu.memory_space<semaphore_mem>>) src(%76 : memref<1x128xf32, #tpu.memory_space<any>>) dst(%77 : memref<1x128xf32, #tpu.memory_space<vmem>>)
      %c0_i32_65 = arith.constant 0 : i32
      %c0_i32_66 = arith.constant 0 : i32
      %80 = tpu.memref_slice %arg2[%47, %c0_i32_66] : memref<1000x128xf32, #tpu.memory_space<any>> -> memref<1x128xf32, #tpu.memory_space<any>>
      %c0_i32_67 = arith.constant 0 : i32
      %c896_i32_68 = arith.constant 896 : i32
      %81 = tpu.memref_slice %arg8[%c0_i32_67, %c896_i32_68] : memref<8x1024xf32, #tpu.memory_space<vmem>> -> memref<1x128xf32, #tpu.memory_space<vmem>>
      %82 = tpu.memref_slice %arg10[%c0_i32_65] : memref<1x!tpu.dma_semaphore, #tpu.memory_space<semaphore_mem>> -> memref<1x!tpu.dma_semaphore, #tpu.memory_space<semaphore_mem>>
      %83 = tpu.memref_squeeze %82 : memref<1x!tpu.dma_semaphore, #tpu.memory_space<semaphore_mem>> -> memref<!tpu.dma_semaphore, #tpu.memory_space<semaphore_mem>>
      tpu.wait_dma2 semaphore(%83 : memref<!tpu.dma_semaphore, #tpu.memory_space<semaphore_mem>>) src(%80 : memref<1x128xf32, #tpu.memory_space<any>>) dst(%81 : memref<1x128xf32, #tpu.memory_space<vmem>>)
      %c0_69 = arith.constant 0 : index
      %c0_70 = arith.constant 0 : index
      %84 = vector.load %arg8[%c0_69, %c0_70] : memref<8x1024xf32, #tpu.memory_space<vmem>>, vector<8x1024xf32>
      %c0_71 = arith.constant 0 : index
      %c0_72 = arith.constant 0 : index
      %85 = vector.load %arg3[%c0_71, %c0_72] : memref<1024x128xf32, #tpu.memory_space<vmem>>, vector<1024x128xf32>
      %cst_73 = arith.constant dense<0.000000e+00> : vector<8x128xf32>
      %86 = tpu.matmul %84, %85, %cst_73 {dimension_numbers = #tpu.dot_dimension_numbers<[1], [0], [0], [1], [0, 0, 1, 1], [], []>} : vector<8x1024xf32>, vector<1024x128xf32>, vector<8x128xf32> -> vector<8x128xf32>
      %c0_74 = arith.constant 0 : index
      %c0_75 = arith.constant 0 : index
      %87 = vector.load %arg4[%c0_74, %c0_75] : memref<1x128xf32, #tpu.memory_space<vmem>>, vector<1x128xf32>
      %88 = vector.broadcast %87 : vector<1x128xf32> to vector<8x128xf32>
      %89 = arith.addf %86, %88 : vector<8x128xf32>
      %90 = math.tanh %89 : vector<8x128xf32>
      %c0_76 = arith.constant 0 : index
      %c0_77 = arith.constant 0 : index
      %91 = vector.load %arg9[%c0_76, %c0_77] : memref<8x128xf32, #tpu.memory_space<vmem>>, vector<8x128xf32>
      tpu.vector_store %arg9[%c0_76, %c0_77], %90 {strides = array<i32>} : memref<8x128xf32, #tpu.memory_space<vmem>>, vector<8x128xf32>,
    } else {
    }
    %c0 = arith.constant 0 : index
    %c0_1 = arith.constant 0 : index
    %3 = vector.load %arg9[%c0, %c0_1] : memref<8x128xf32, #tpu.memory_space<vmem>>, vector<8x128xf32>
    %c0_2 = arith.constant 0 : index
    %c0_3 = arith.constant 0 : index
    %4 = vector.load %arg5[%c0_2, %c0_3] : memref<128x1024xf32, #tpu.memory_space<vmem>>, vector<128x1024xf32>
    %cst = arith.constant dense<0.000000e+00> : vector<8x1024xf32>
    %5 = tpu.matmul %3, %4, %cst {dimension_numbers = #tpu.dot_dimension_numbers<[1], [0], [0], [1], [0, 0, 1, 1], [], []>} : vector<8x128xf32>, vector<128x1024xf32>, vector<8x1024xf32> -> vector<8x1024xf32>
    %c0_4 = arith.constant 0 : index
    %c0_5 = arith.constant 0 : index
    %6 = vector.load %arg6[%c0_4, %c0_5] : memref<1x1024xf32, #tpu.memory_space<vmem>>, vector<1x1024xf32>
    %7 = vector.broadcast %6 : vector<1x1024xf32> to vector<8x1024xf32>
    %8 = arith.addf %5, %7 : vector<8x1024xf32>
    %c0_6 = arith.constant 0 : index
    %c0_7 = arith.constant 0 : index
    %9 = vector.load %arg7[%c0_6, %c0_7] : memref<8x1024xf32, #tpu.memory_space<vmem>>, vector<8x1024xf32>
    tpu.vector_store %arg7[%c0_6, %c0_7], %8 {strides = array<i32>} : memref<8x1024xf32, #tpu.memory_space<vmem>>, vector<8x1024xf32>,
    return
  }
  func.func @transform_1(%arg0: i32, %arg1: memref<8xi32, #tpu.memory_space<smem>>) -> (i32, i32) {
    %c0_i32 = arith.constant 0 : i32
    %c0_i32_0 = arith.constant 0 : i32
    %c0_i32_1 = arith.constant 0 : i32
    return %c0_i32, %c0_i32_0 : i32, i32
  }
  func.func @transform_2(%arg0: i32, %arg1: memref<8xi32, #tpu.memory_space<smem>>) -> (i32, i32) {
    %c0_i32 = arith.constant 0 : i32
    %c0_i32_0 = arith.constant 0 : i32
    %c0_i32_1 = arith.constant 0 : i32
    return %c0_i32, %c0_i32_0 : i32, i32
  }
  func.func @transform_3(%arg0: i32, %arg1: memref<8xi32, #tpu.memory_space<smem>>) -> (i32, i32) {
    %c0_i32 = arith.constant 0 : i32
    %c0_i32_0 = arith.constant 0 : i32
    return %c0_i32, %arg0 : i32, i32
  }
  func.func @transform_4(%arg0: i32, %arg1: memref<8xi32, #tpu.memory_space<smem>>) -> (i32, i32) {
    %c0_i32 = arith.constant 0 : i32
    %c0_i32_0 = arith.constant 0 : i32
    return %c0_i32, %arg0 : i32, i32
  }
  func.func @transform_5(%arg0: i32, %arg1: memref<8xi32, #tpu.memory_space<smem>>) -> (i32, i32) {
    %c0_i32 = arith.constant 0 : i32
    %c0_i32_0 = arith.constant 0 : i32
    return %c0_i32, %arg0 : i32, i32
  }
}

</mosaic_0001>

<llo_original>
// kernel: tpu_custom_call.1
$region0: #{tpu_custom_call.1}
  #allocation0 [shape = 'u32[]', space=smem, size = 0x4, offset = 0x4, fixed_abs, tag = 'smem constant byte address 0x4 - core index']
  #allocation1 [shape = 'u32[72,128]{1,0:T(1,128)}', space=vmem, size = 0x9000, scoped, tag = 'internal scratch']
  #allocation2 [shape = 'f32[8,1024]{1,0:T(8,128)}', space=vmem, size = 0x8000, scoped, tag = 'scratch operand']
  #allocation3 [shape = 'f32[8,128]{1,0:T(8,128)}', space=vmem, size = 0x1000, scoped, tag = 'scratch operand']
  #allocation4 [shape = 's32[1]{0}', space=sflag, size = 0x4, scoped, tag = 'scratch operand']
  #allocation5 [shape = 's32[1]{0}', space=sflag, size = 0x4, scoped, tag = 'scoped memory for tpu_custom_call.1']
  #allocation6 [shape = 'u8[512]{0}', space=smem, size = 0x200, scoped, tag = 'prefetched SMEM operand 0']
  #allocation14 [shape = 's32[]', space=sflag, size = 0x4, offset = 0, fixed_abs, tag = 'sflag constant byte address 0x0 - dummy sync flag']
  #allocation15 [shape = 's32[]', space=sflag, size = 0x4, offset = 0, fixed_abs, tag = 'sflag constant byte address 0x0 - dummy sync flag']
  #allocation16 [shape = 'u32[]', space=smem, size = 0x4, offset = 0x44, fixed_abs, tag = 'smem constant byte address 0x44 - assertion arg 0']
  #allocation17 [shape = 'u32[]', space=smem, size = 0x4, offset = 0x48, fixed_abs, tag = 'smem constant byte address 0x48 - assertion arg 1']
  #allocation18 [shape = 's32[]', space=sflag, size = 0x4, offset = 0, fixed_abs, tag = 'sflag constant byte address 0x0 - dummy sync flag']
  #allocation19 [shape = 's32[]', space=sflag, size = 0x4, offset = 0, fixed_abs, tag = 'sflag constant byte address 0x0 - dummy sync flag']
  #allocation20 [shape = 's32[]', space=sflag, size = 0x4, offset = 0, fixed_abs, tag = 'sflag constant byte address 0x0 - dummy sync flag']
  #allocation21 [shape = 's32[]', space=sflag, size = 0x4, offset = 0, fixed_abs, tag = 'sflag constant byte address 0x0 - dummy sync flag']
  #allocation22 [shape = 's32[]', space=sflag, size = 0x4, offset = 0, fixed_abs, tag = 'sflag constant byte address 0x0 - dummy sync flag']
  #allocation23 [shape = 's32[]', space=sflag, size = 0x4, offset = 0, fixed_abs, tag = 'sflag constant byte address 0x0 - dummy sync flag']
  #allocation24 [shape = 's32[]', space=sflag, size = 0x4, offset = 0, fixed_abs, tag = 'sflag constant byte address 0x0 - dummy sync flag']
  #allocation25 [shape = 's32[]', space=sflag, size = 0x4, offset = 0, fixed_abs, tag = 'sflag constant byte address 0x0 - dummy sync flag']
  #allocation26 [shape = 's32[]', space=sflag, size = 0x4, offset = 0, fixed_abs, tag = 'sflag constant byte address 0x0 - dummy sync flag']
  #allocation27 [shape = 's32[]', space=sflag, size = 0x4, offset = 0, fixed_abs, tag = 'sflag constant byte address 0x0 - dummy sync flag']
  #allocation28 [shape = 's32[]', space=sflag, size = 0x4, offset = 0, fixed_abs, tag = 'sflag constant byte address 0x0 - dummy sync flag']
  #allocation29 [shape = 's32[]', space=sflag, size = 0x4, offset = 0, fixed_abs, tag = 'sflag constant byte address 0x0 - dummy sync flag']
  #allocation30 [shape = 's32[]', space=sflag, size = 0x4, offset = 0, fixed_abs, tag = 'sflag constant byte address 0x0 - dummy sync flag']
  #allocation31 [shape = 's32[]', space=sflag, size = 0x4, offset = 0, fixed_abs, tag = 'sflag constant byte address 0x0 - dummy sync flag']
  %s0 = inlined_call_operand.hbm [shape: s32[8], index: 0, kind: input, shape index: {}]
  %s1 = inlined_call_operand.hbm [shape: f32[1000,128], index: 1, kind: input, shape index: {}]
  %s2 = inlined_call_operand.hbm [shape: f32[1024,128], index: 2, kind: input, shape index: {}]
  %s3 = inlined_call_operand.vmem [shape: f32[1,128], index: 3, kind: input, shape index: {}]
  %s4 = inlined_call_operand.hbm [shape: f32[128,1024], index: 4, kind: input, shape index: {}]
  %s5 = inlined_call_operand.hbm [shape: f32[1,1024], index: 5, kind: input, shape index: {}]
  %s6 = inlined_call_operand.hbm [shape: f32[8,1024], index: 6, kind: output, shape index: {}]
  %s7 = sld [smem:[#allocation0]]
  $region74: #{tpu_custom_call.1} parent=0
    _
  %s9 = ssub.s32 1, %s7
  %s10 = scalar_select 0, %s9, %s7
  %s12 = sshll.u32 %s0, 4
  %s13 = int_to_ptr.hbm [resolvable:$true] %s12
  %15 = dma.hbm_to_smem %s13, 16, [#allocation6], [#allocation5]
  %17 = dma.done [#allocation5], 16
  %18 = sfence
  $region1: #{tpu_custom_call.1} parent=0
    #allocation7 [shape = 'u8[524288]{0}', space=vmem, size = 0x80000, scoped, tag = 'input window, operand 2, single buffered']
    #allocation8 [shape = 's32[1]{0}', space=sflag, size = 0x4, scoped, tag = 'scoped memory for tpu_custom_call.1']
    #allocation9 [shape = 's32[1]{0}', space=sflag, size = 0x4, scoped, tag = 'scoped memory for tpu_custom_call.1']
    #allocation10 [shape = 'u8[524288]{0}', space=vmem, size = 0x80000, scoped, tag = 'input window, operand 4, single buffered']
    #allocation11 [shape = 's32[1]{0}', space=sflag, size = 0x4, scoped, tag = 'scoped memory for tpu_custom_call.1']
    #allocation12 [shape = 'u8[4096]{0}', space=vmem, size = 0x1000, scoped, tag = 'input window, operand 5, single buffered']
    #allocation13 [shape = 'u8[32768]{0}', space=vmem, size = 0x8000, scoped, tag = 'output window, operand 0, single buffered']
    %19 = vsyncpa [#allocation8], 0
    %20 = vsyncpa [#allocation11], 0
    %21 = vsyncpa [#allocation9], 0
    // Predicated region
    $region2: #{tpu_custom_call.1} parent=1 // pred_check
      _
    $region3: #{tpu_custom_call.1} parent=1 // pred_check_branch
      %23 = sbr.rel (0) target = $region5
    $region4: #{tpu_custom_call.1} parent=1 // pred_region
      %25 = vsyncadd [#allocation8], 0
      %s26 = sshll.u32 %s2, 4
      %s27 = int_to_ptr.hbm [resolvable:$true] %s26
      %s28 = sshll.u32 [#allocation7], 4
      %s29 = int_to_ptr.vmem [resolvable:$true] %s28
      %34 = dma.hbm_to_vmem [thread:$0]  %s27, 16384, %s29, [#allocation8], 128, 128, 8
    $region5: #{tpu_custom_call.1} parent=1 // pred_fallthru
      _
    // Predicated region
    $region6: #{tpu_custom_call.1} parent=1 // pred_check
      _
    $region7: #{tpu_custom_call.1} parent=1 // pred_check_branch
      %36 = sbr.rel (0) target = $region9
    $region8: #{tpu_custom_call.1} parent=1 // pred_region
      _
    $region9: #{tpu_custom_call.1} parent=1 // pred_fallthru
      _
    // Predicated region
    $region10: #{tpu_custom_call.1} parent=1 // pred_check
      _
    $region11: #{tpu_custom_call.1} parent=1 // pred_check_branch
      %38 = sbr.rel (0) target = $region13
    $region12: #{tpu_custom_call.1} parent=1 // pred_region
      %40 = vsyncadd [#allocation11], 0
      %s41 = sshll.u32 %s4, 4
      %s42 = int_to_ptr.hbm [resolvable:$true] %s41
      %s43 = sshll.u32 [#allocation10], 4
      %s44 = int_to_ptr.vmem [resolvable:$true] %s43
      %49 = dma.hbm_to_vmem [thread:$0]  %s42, 16384, %s44, [#allocation11], 1024, 1024, 64
    $region13: #{tpu_custom_call.1} parent=1 // pred_fallthru
      _
    // Predicated region
    $region14: #{tpu_custom_call.1} parent=1 // pred_check
      _
    $region15: #{tpu_custom_call.1} parent=1 // pred_check_branch
      %51 = sbr.rel (0) target = $region17
    $region16: #{tpu_custom_call.1} parent=1 // pred_region
      %53 = vsyncadd [#allocation11], 0
      %s55 = sshll.u32 %s5, 4
      %s56 = int_to_ptr.hbm [resolvable:$true] %s55
      %s57 = sshll.u32 [#allocation12], 4
      %s58 = int_to_ptr.vmem [resolvable:$true] %s57
      %60 = dma.hbm_to_vmem [thread:$0]  %s56, 128, %s58, [#allocation11]
    $region17: #{tpu_custom_call.1} parent=1 // pred_fallthru
      _
    // Predicated region
    $region18: #{tpu_custom_call.1} parent=1 // pred_check
      _
    $region19: #{tpu_custom_call.1} parent=1 // pred_check_branch
      %62 = sbr.rel (0) target = $region21
    $region20: #{tpu_custom_call.1} parent=1 // pred_region
      %64 = dma.done [#allocation8], 16384
    $region21: #{tpu_custom_call.1} parent=1 // pred_fallthru
      _
    // Predicated region
    $region22: #{tpu_custom_call.1} parent=1 // pred_check
      _
    $region23: #{tpu_custom_call.1} parent=1 // pred_check_branch
      %66 = sbr.rel (0) target = $region25
    $region24: #{tpu_custom_call.1} parent=1 // pred_region
      %68 = dma.done [#allocation11], 16384
    $region25: #{tpu_custom_call.1} parent=1 // pred_fallthru
      _
    // Predicated region
    $region26: #{tpu_custom_call.1} parent=1 // pred_check
      _
    $region27: #{tpu_custom_call.1} parent=1 // pred_check_branch
      %70 = sbr.rel (0) target = $region29
    $region28: #{tpu_custom_call.1} parent=1 // pred_region
      %72 = dma.done [#allocation11], 128
    $region29: #{tpu_custom_call.1} parent=1 // pred_fallthru
      _
    %p73 = scmp.eq.s32.totalorder 0, 0
    // Predicated region
    $region30: #{tpu_custom_call.1} parent=1 // pred_check
      %p74 = pneg %p73
    $region31: #{tpu_custom_call.1} parent=1 // pred_check_branch
      %76 = sbr.rel (%p74) target = $region33
    $region32: #{tpu_custom_call.1} parent=1 // pred_region
      %77 = vst [vmem:[#allocation2] sm:$0xfe] 0.0
      %78 = vst [vmem:[#allocation2 + $0x8] sm:$0xfe] 0.0
      %79 = vst [vmem:[#allocation2 + $0x10] sm:$0xfe] 0.0
      %80 = vst [vmem:[#allocation2 + $0x18] sm:$0xfe] 0.0
      %81 = vst [vmem:[#allocation2 + $0x20] sm:$0xfe] 0.0
      %82 = vst [vmem:[#allocation2 + $0x28] sm:$0xfe] 0.0
      %83 = vst [vmem:[#allocation2 + $0x30] sm:$0xfe] 0.0
      %84 = vst [vmem:[#allocation2 + $0x38] sm:$0xfe] 0.0
      %s85 = sld [smem:[#allocation6]]
      %s86 = scalar_lea.hbm %s1, %s85
      // Predicated region
      $region34: #{tpu_custom_call.1} parent=32 // pred_check
        _
      $region35: #{tpu_custom_call.1} parent=32 // pred_check_branch
        %88 = sbr.rel target = $region37
      $region36: #{tpu_custom_call.1} parent=32 // pred_region
        %89 = sst [smem:[#allocation16]] [#allocation15]
        %90 = sst [smem:[#allocation17]] [#allocation14]
      $region37: #{tpu_custom_call.1} parent=32 // pred_fallthru
        _
      %92 = shalt.err (0)
      %s94 = sshll.u32 %s86, 4
      %s95 = int_to_ptr.hbm [resolvable:$true] %s94
      %s96 = sshll.u32 [#allocation2], 4
      %s97 = int_to_ptr.vmem [resolvable:$true] %s96
      %99 = dma.hbm_to_vmem [thread:$0]  %s95, 16, %s97, [#allocation4]
      %s100 = sld [smem:[#allocation6 + $0x1]]
      %s101 = scalar_lea.hbm %s1, %s100
      %s102 = scalar_lea.vmem [#allocation2], 8
      // Predicated region
      $region38: #{tpu_custom_call.1} parent=32 // pred_check
        _
      $region39: #{tpu_custom_call.1} parent=32 // pred_check_branch
        %104 = sbr.rel target = $region41
      $region40: #{tpu_custom_call.1} parent=32 // pred_region
        %105 = sst [smem:[#allocation16]] [#allocation19]
        %106 = sst [smem:[#allocation17]] [#allocation18]
      $region41: #{tpu_custom_call.1} parent=32 // pred_fallthru
        _
      %108 = shalt.err (0)
      %s110 = sshll.u32 %s101, 4
      %s111 = int_to_ptr.hbm [resolvable:$true] %s110
      %s112 = sshll.u32 %s102, 4
      %s113 = int_to_ptr.vmem [resolvable:$true] %s112
      %115 = dma.hbm_to_vmem [thread:$0]  %s111, 16, %s113, [#allocation4]
      %s116 = sld [smem:[#allocation6 + $0x2]]
      %s117 = scalar_lea.hbm %s1, %s116
      %s118 = scalar_lea.vmem [#allocation2], 16
      // Predicated region
      $region42: #{tpu_custom_call.1} parent=32 // pred_check
        _
      $region43: #{tpu_custom_call.1} parent=32 // pred_check_branch
        %120 = sbr.rel target = $region45
      $region44: #{tpu_custom_call.1} parent=32 // pred_region
        %121 = sst [smem:[#allocation16]] [#allocation21]
        %122 = sst [smem:[#allocation17]] [#allocation20]
      $region45: #{tpu_custom_call.1} parent=32 // pred_fallthru
        _
      %124 = shalt.err (0)
      %s126 = sshll.u32 %s117, 4
      %s127 = int_to_ptr.hbm [resolvable:$true] %s126
      %s128 = sshll.u32 %s118, 4
      %s129 = int_to_ptr.vmem [resolvable:$true] %s128
      %131 = dma.hbm_to_vmem [thread:$0]  %s127, 16, %s129, [#allocation4]
      %s132 = sld [smem:[#allocation6 + $0x3]]
      %s133 = scalar_lea.hbm %s1, %s132
      %s134 = scalar_lea.vmem [#allocation2], 24
      // Predicated region
      $region46: #{tpu_custom_call.1} parent=32 // pred_check
        _
      $region47: #{tpu_custom_call.1} parent=32 // pred_check_branch
        %136 = sbr.rel target = $region49
      $region48: #{tpu_custom_call.1} parent=32 // pred_region
        %137 = sst [smem:[#allocation16]] [#allocation23]
        %138 = sst [smem:[#allocation17]] [#allocation22]
      $region49: #{tpu_custom_call.1} parent=32 // pred_fallthru
        _
      %140 = shalt.err (0)
      %s142 = sshll.u32 %s133, 4
      %s143 = int_to_ptr.hbm [resolvable:$true] %s142
      %s144 = sshll.u32 %s134, 4
      %s145 = int_to_ptr.vmem [resolvable:$true] %s144
      %147 = dma.hbm_to_vmem [thread:$0]  %s143, 16, %s145, [#allocation4]
      %s148 = sld [smem:[#allocation6 + $0x4]]
      %s149 = scalar_lea.hbm %s1, %s148
      %s150 = scalar_lea.vmem [#allocation2], 32
      // Predicated region
      $region50: #{tpu_custom_call.1} parent=32 // pred_check
        _
      $region51: #{tpu_custom_call.1} parent=32 // pred_check_branch
        %152 = sbr.rel target = $region53
      $region52: #{tpu_custom_call.1} parent=32 // pred_region
        %153 = sst [smem:[#allocation16]] [#allocation25]
        %154 = sst [smem:[#allocation17]] [#allocation24]
      $region53: #{tpu_custom_call.1} parent=32 // pred_fallthru
        _
      %156 = shalt.err (0)
      %s158 = sshll.u32 %s149, 4
      %s159 = int_to_ptr.hbm [resolvable:$true] %s158
      %s160 = sshll.u32 %s150, 4
      %s161 = int_to_ptr.vmem [resolvable:$true] %s160
      %163 = dma.hbm_to_vmem [thread:$0]  %s159, 16, %s161, [#allocation4]
      %s164 = sld [smem:[#allocation6 + $0x5]]
      %s165 = scalar_lea.hbm %s1, %s164
      %s166 = scalar_lea.vmem [#allocation2], 40
      // Predicated region
      $region54: #{tpu_custom_call.1} parent=32 // pred_check
        _
      $region55: #{tpu_custom_call.1} parent=32 // pred_check_branch
        %168 = sbr.rel target = $region57
      $region56: #{tpu_custom_call.1} parent=32 // pred_region
        %169 = sst [smem:[#allocation16]] [#allocation27]
        %170 = sst [smem:[#allocation17]] [#allocation26]
      $region57: #{tpu_custom_call.1} parent=32 // pred_fallthru
        _
      %172 = shalt.err (0)
      %s174 = sshll.u32 %s165, 4
      %s175 = int_to_ptr.hbm [resolvable:$true] %s174
      %s176 = sshll.u32 %s166, 4
      %s177 = int_to_ptr.vmem [resolvable:$true] %s176
      %179 = dma.hbm_to_vmem [thread:$0]  %s175, 16, %s177, [#allocation4]
      %s180 = sld [smem:[#allocation6 + $0x6]]
      %s181 = scalar_lea.hbm %s1, %s180
      %s182 = scalar_lea.vmem [#allocation2], 48
      // Predicated region
      $region58: #{tpu_custom_call.1} parent=32 // pred_check
        _
      $region59: #{tpu_custom_call.1} parent=32 // pred_check_branch
        %184 = sbr.rel target = $region61
      $region60: #{tpu_custom_call.1} parent=32 // pred_region
        %185 = sst [smem:[#allocation16]] [#allocation29]
        %186 = sst [smem:[#allocation17]] [#allocation28]
      $region61: #{tpu_custom_call.1} parent=32 // pred_fallthru
        _
      %188 = shalt.err (0)
      %s190 = sshll.u32 %s181, 4
      %s191 = int_to_ptr.hbm [resolvable:$true] %s190
      %s192 = sshll.u32 %s182, 4
      %s193 = int_to_ptr.vmem [resolvable:$true] %s192
      %195 = dma.hbm_to_vmem [thread:$0]  %s191, 16, %s193, [#allocation4]
      %s196 = sld [smem:[#allocation6 + $0x7]]
      %s197 = scalar_lea.hbm %s1, %s196
      %s198 = scalar_lea.vmem [#allocation2], 56
      // Predicated region
      $region62: #{tpu_custom_call.1} parent=32 // pred_check
        _
      $region63: #{tpu_custom_call.1} parent=32 // pred_check_branch
        %200 = sbr.rel target = $region65
      $region64: #{tpu_custom_call.1} parent=32 // pred_region
        %201 = sst [smem:[#allocation16]] [#allocation31]
        %202 = sst [smem:[#allocation17]] [#allocation30]
      $region65: #{tpu_custom_call.1} parent=32 // pred_fallthru
        _
      %204 = shalt.err (0)
      %s206 = sshll.u32 %s197, 4
      %s207 = int_to_ptr.hbm [resolvable:$true] %s206
      %s208 = sshll.u32 %s198, 4
      %s209 = int_to_ptr.vmem [resolvable:$true] %s208
      %211 = dma.hbm_to_vmem [thread:$0]  %s207, 16, %s209, [#allocation4]
      %s212 = smul.u32 1, 1
      %s213 = sshll.u32 %s212, 4
      %214 = dma.done [#allocation4], %s213
      %s215 = sshll.u32 %s212, 4
      %216 = dma.done [#allocation4], %s215
      %s217 = sshll.u32 %s212, 4
      %218 = dma.done [#allocation4], %s217
      %s219 = sshll.u32 %s212, 4
      %220 = dma.done [#allocation4], %s219
      %s221 = sshll.u32 %s212, 4
      %222 = dma.done [#allocation4], %s221
      %s223 = sshll.u32 %s212, 4
      %224 = dma.done [#allocation4], %s223
      %s225 = sshll.u32 %s212, 4
      %226 = dma.done [#allocation4], %s225
      %s227 = sshll.u32 %s212, 4
      %228 = dma.done [#allocation4], %s227
      %v229 = vld [vmem:[#allocation2] sm:$0xff]
      %v230 = vld [vmem:[#allocation2 + $0x8] sm:$0xff]
      %v231 = vld [vmem:[#allocation2 + $0x10] sm:$0xff]
      %v232 = vld [vmem:[#allocation2 + $0x18] sm:$0xff]
      %v233 = vld [vmem:[#allocation2 + $0x20] sm:$0xff]
      %v234 = vld [vmem:[#allocation2 + $0x28] sm:$0xff]
      %v235 = vld [vmem:[#allocation2 + $0x30] sm:$0xff]
      %v236 = vld [vmem:[#allocation2 + $0x38] sm:$0xff]
      %v237 = vld [vmem:[#allocation7] sm:$0xff]
      %v238 = vld [vmem:[#allocation7 + $0x8] sm:$0xff]
      %v239 = vld [vmem:[#allocation7 + $0x10] sm:$0xff]
      %v240 = vld [vmem:[#allocation7 + $0x18] sm:$0xff]
      %v241 = vld [vmem:[#allocation7 + $0x20] sm:$0xff]
      %v242 = vld [vmem:[#allocation7 + $0x28] sm:$0xff]
      %v243 = vld [vmem:[#allocation7 + $0x30] sm:$0xff]
      %v244 = vld [vmem:[#allocation7 + $0x38] sm:$0xff]
      %v245 = vld [vmem:[#allocation7 + $0x40] sm:$0xff]
      %v246 = vld [vmem:[#allocation7 + $0x48] sm:$0xff]
      %v247 = vld [vmem:[#allocation7 + $0x50] sm:$0xff]
      %v248 = vld [vmem:[#allocation7 + $0x58] sm:$0xff]
      %v249 = vld [vmem:[#allocation7 + $0x60] sm:$0xff]
      %v250 = vld [vmem:[#allocation7 + $0x68] sm:$0xff]
      %v251 = vld [vmem:[#allocation7 + $0x70] sm:$0xff]
      %v252 = vld [vmem:[#allocation7 + $0x78] sm:$0xff]
      %v253 = vld [vmem:[#allocation7 + $0x80] sm:$0xff]
      %v254 = vld [vmem:[#allocation7 + $0x88] sm:$0xff]
      %v255 = vld [vmem:[#allocation7 + $0x90] sm:$0xff]
      %v256 = vld [vmem:[#allocation7 + $0x98] sm:$0xff]
      %v257 = vld [vmem:[#allocation7 + $0xa0] sm:$0xff]
      %v258 = vld [vmem:[#allocation7 + $0xa8] sm:$0xff]
      %v259 = vld [vmem:[#allocation7 + $0xb0] sm:$0xff]
      %v260 = vld [vmem:[#allocation7 + $0xb8] sm:$0xff]
      %v261 = vld [vmem:[#allocation7 + $0xc0] sm:$0xff]
      %v262 = vld [vmem:[#allocation7 + $0xc8] sm:$0xff]
      %v263 = vld [vmem:[#allocation7 + $0xd0] sm:$0xff]
      %v264 = vld [vmem:[#allocation7 + $0xd8] sm:$0xff]
      %v265 = vld [vmem:[#allocation7 + $0xe0] sm:$0xff]
      %v266 = vld [vmem:[#allocation7 + $0xe8] sm:$0xff]
      %v267 = vld [vmem:[#allocation7 + $0xf0] sm:$0xff]
      %v268 = vld [vmem:[#allocation7 + $0xf8] sm:$0xff]
      %v269 = vld [vmem:[#allocation7 + $0x100] sm:$0xff]
      %v270 = vld [vmem:[#allocation7 + $0x108] sm:$0xff]
      %v271 = vld [vmem:[#allocation7 + $0x110] sm:$0xff]
      %v272 = vld [vmem:[#allocation7 + $0x118] sm:$0xff]
      %v273 = vld [vmem:[#allocation7 + $0x120] sm:$0xff]
      %v274 = vld [vmem:[#allocation7 + $0x128] sm:$0xff]
      %v275 = vld [vmem:[#allocation7 + $0x130] sm:$0xff]
      %v276 = vld [vmem:[#allocation7 + $0x138] sm:$0xff]
      %v277 = vld [vmem:[#allocation7 + $0x140] sm:$0xff]
      %v278 = vld [vmem:[#allocation7 + $0x148] sm:$0xff]
      %v279 = vld [vmem:[#allocation7 + $0x150] sm:$0xff]
      %v280 = vld [vmem:[#allocation7 + $0x158] sm:$0xff]
      %v281 = vld [vmem:[#allocation7 + $0x160] sm:$0xff]
      %v282 = vld [vmem:[#allocation7 + $0x168] sm:$0xff]
      %v283 = vld [vmem:[#allocation7 + $0x170] sm:$0xff]
      %v284 = vld [vmem:[#allocation7 + $0x178] sm:$0xff]
      %v285 = vld [vmem:[#allocation7 + $0x180] sm:$0xff]
      %v286 = vld [vmem:[#allocation7 + $0x188] sm:$0xff]
      %v287 = vld [vmem:[#allocation7 + $0x190] sm:$0xff]
      %v288 = vld [vmem:[#allocation7 + $0x198] sm:$0xff]
      %v289 = vld [vmem:[#allocation7 + $0x1a0] sm:$0xff]
      %v290 = vld [vmem:[#allocation7 + $0x1a8] sm:$0xff]
      %v291 = vld [vmem:[#allocation7 + $0x1b0] sm:$0xff]
      %v292 = vld [vmem:[#allocation7 + $0x1b8] sm:$0xff]
      %v293 = vld [vmem:[#allocation7 + $0x1c0] sm:$0xff]
      %v294 = vld [vmem:[#allocation7 + $0x1c8] sm:$0xff]
      %v295 = vld [vmem:[#allocation7 + $0x1d0] sm:$0xff]
      %v296 = vld [vmem:[#allocation7 + $0x1d8] sm:$0xff]
      %v297 = vld [vmem:[#allocation7 + $0x1e0] sm:$0xff]
      %v298 = vld [vmem:[#allocation7 + $0x1e8] sm:$0xff]
      %v299 = vld [vmem:[#allocation7 + $0x1f0] sm:$0xff]
      %v300 = vld [vmem:[#allocation7 + $0x1f8] sm:$0xff]
      %v301 = vld [vmem:[#allocation7 + $0x200] sm:$0xff]
      %v302 = vld [vmem:[#allocation7 + $0x208] sm:$0xff]
      %v303 = vld [vmem:[#allocation7 + $0x210] sm:$0xff]
      %v304 = vld [vmem:[#allocation7 + $0x218] sm:$0xff]
      %v305 = vld [vmem:[#allocation7 + $0x220] sm:$0xff]
      %v306 = vld [vmem:[#allocation7 + $0x228] sm:$0xff]
      %v307 = vld [vmem:[#allocation7 + $0x230] sm:$0xff]
      %v308 = vld [vmem:[#allocation7 + $0x238] sm:$0xff]
      %v309 = vld [vmem:[#allocation7 + $0x240] sm:$0xff]
      %v310 = vld [vmem:[#allocation7 + $0x248] sm:$0xff]
      %v311 = vld [vmem:[#allocation7 + $0x250] sm:$0xff]
      %v312 = vld [vmem:[#allocation7 + $0x258] sm:$0xff]
      %v313 = vld [vmem:[#allocation7 + $0x260] sm:$0xff]
      %v314 = vld [vmem:[#allocation7 + $0x268] sm:$0xff]
      %v315 = vld [vmem:[#allocation7 + $0x270] sm:$0xff]
      %v316 = vld [vmem:[#allocation7 + $0x278] sm:$0xff]
      %v317 = vld [vmem:[#allocation7 + $0x280] sm:$0xff]
      %v318 = vld [vmem:[#allocation7 + $0x288] sm:$0xff]
      %v319 = vld [vmem:[#allocation7 + $0x290] sm:$0xff]
      %v320 = vld [vmem:[#allocation7 + $0x298] sm:$0xff]
      %v321 = vld [vmem:[#allocation7 + $0x2a0] sm:$0xff]
      %v322 = vld [vmem:[#allocation7 + $0x2a8] sm:$0xff]
      %v323 = vld [vmem:[#allocation7 + $0x2b0] sm:$0xff]
      %v324 = vld [vmem:[#allocation7 + $0x2b8] sm:$0xff]
      %v325 = vld [vmem:[#allocation7 + $0x2c0] sm:$0xff]
      %v326 = vld [vmem:[#allocation7 + $0x2c8] sm:$0xff]
      %v327 = vld [vmem:[#allocation7 + $0x2d0] sm:$0xff]
      %v328 = vld [vmem:[#allocation7 + $0x2d8] sm:$0xff]
      %v329 = vld [vmem:[#allocation7 + $0x2e0] sm:$0xff]
      %v330 = vld [vmem:[#allocation7 + $0x2e8] sm:$0xff]
      %v331 = vld [vmem:[#allocation7 + $0x2f0] sm:$0xff]
      %v332 = vld [vmem:[#allocation7 + $0x2f8] sm:$0xff]
      %v333 = vld [vmem:[#allocation7 + $0x300] sm:$0xff]
      %v334 = vld [vmem:[#allocation7 + $0x308] sm:$0xff]
      %v335 = vld [vmem:[#allocation7 + $0x310] sm:$0xff]
      %v336 = vld [vmem:[#allocation7 + $0x318] sm:$0xff]
      %v337 = vld [vmem:[#allocation7 + $0x320] sm:$0xff]
      %v338 = vld [vmem:[#allocation7 + $0x328] sm:$0xff]
      %v339 = vld [vmem:[#allocation7 + $0x330] sm:$0xff]
      %v340 = vld [vmem:[#allocation7 + $0x338] sm:$0xff]
      %v341 = vld [vmem:[#allocation7 + $0x340] sm:$0xff]
      %v342 = vld [vmem:[#allocation7 + $0x348] sm:$0xff]
      %v343 = vld [vmem:[#allocation7 + $0x350] sm:$0xff]
      %v344 = vld [vmem:[#allocation7 + $0x358] sm:$0xff]
      %v345 = vld [vmem:[#allocation7 + $0x360] sm:$0xff]
      %v346 = vld [vmem:[#allocation7 + $0x368] sm:$0xff]
      %v347 = vld [vmem:[#allocation7 + $0x370] sm:$0xff]
      %v348 = vld [vmem:[#allocation7 + $0x378] sm:$0xff]
      %v349 = vld [vmem:[#allocation7 + $0x380] sm:$0xff]
      %v350 = vld [vmem:[#allocation7 + $0x388] sm:$0xff]
      %v351 = vld [vmem:[#allocation7 + $0x390] sm:$0xff]
      %v352 = vld [vmem:[#allocation7 + $0x398] sm:$0xff]
      %v353 = vld [vmem:[#allocation7 + $0x3a0] sm:$0xff]
      %v354 = vld [vmem:[#allocation7 + $0x3a8] sm:$0xff]
      %v355 = vld [vmem:[#allocation7 + $0x3b0] sm:$0xff]
      %v356 = vld [vmem:[#allocation7 + $0x3b8] sm:$0xff]
      %v357 = vld [vmem:[#allocation7 + $0x3c0] sm:$0xff]
      %v358 = vld [vmem:[#allocation7 + $0x3c8] sm:$0xff]
      %v359 = vld [vmem:[#allocation7 + $0x3d0] sm:$0xff]
      %v360 = vld [vmem:[#allocation7 + $0x3d8] sm:$0xff]
      %v361 = vld [vmem:[#allocation7 + $0x3e0] sm:$0xff]
      %v362 = vld [vmem:[#allocation7 + $0x3e8] sm:$0xff]
      %v363 = vld [vmem:[#allocation7 + $0x3f0] sm:$0xff]
      %v364 = vld [vmem:[#allocation7 + $0x3f8] sm:$0xff]
      %v365 = vld [vmem:[%s3] sm:$0x1]
      %v367 = vperm.slane %v365, 0
      %369 = vmatpush.msra.mxu0 %v252
      %370 = vmatpush.msra.mxu0 %v251
      %371 = vmatpush.msra.mxu0 %v250
      %372 = vmatpush.msra.mxu0 %v249
      %373 = vmatpush.msra.mxu0 %v248
      %374 = vmatpush.msra.mxu0 %v247
      %375 = vmatpush.msra.mxu0 %v246
      %376 = vmatpush.msra.mxu0 %v245
      %377 = vmatpush.msra.mxu0 %v244
      %378 = vmatpush.msra.mxu0 %v243
      %379 = vmatpush.msra.mxu0 %v242
      %380 = vmatpush.msra.mxu0 %v241
      %381 = vmatpush.msra.mxu0 %v240
      %382 = vmatpush.msra.mxu0 %v239
      %383 = vmatpush.msra.mxu0 %v238
      %384 = vmatpush.msra.mxu0 %v237
      %385 = vmatmul.f32.gmra.mxu0 %v229
      %v386 = vpop.f32.mrf.mxu0
      %v387 = vadd.f32 %v367, %v386
      %388 = vdwg.mxu0
      %389 = vmatpush.msra.mxu0 %v268
      %390 = vmatpush.msra.mxu0 %v267
      %391 = vmatpush.msra.mxu0 %v266
      %392 = vmatpush.msra.mxu0 %v265
      %393 = vmatpush.msra.mxu0 %v264
      %394 = vmatpush.msra.mxu0 %v263
      %395 = vmatpush.msra.mxu0 %v262
      %396 = vmatpush.msra.mxu0 %v261
      %397 = vmatpush.msra.mxu0 %v260
      %398 = vmatpush.msra.mxu0 %v259
      %399 = vmatpush.msra.mxu0 %v258
      %400 = vmatpush.msra.mxu0 %v257
      %401 = vmatpush.msra.mxu0 %v256
      %402 = vmatpush.msra.mxu0 %v255
      %403 = vmatpush.msra.mxu0 %v254
      %404 = vmatpush.msra.mxu0 %v253
      %405 = vmatmul.f32.gmra.mxu0 %v230
      %v406 = vpop.f32.mrf.mxu0
      %v407 = vadd.f32 %v387, %v406
      %408 = vdwg.mxu0
      %409 = vmatpush.msra.mxu0 %v284
      %410 = vmatpush.msra.mxu0 %v283
      %411 = vmatpush.msra.mxu0 %v282
      %412 = vmatpush.msra.mxu0 %v281
      %413 = vmatpush.msra.mxu0 %v280
      %414 = vmatpush.msra.mxu0 %v279
      %415 = vmatpush.msra.mxu0 %v278
      %416 = vmatpush.msra.mxu0 %v277
      %417 = vmatpush.msra.mxu0 %v276
      %418 = vmatpush.msra.mxu0 %v275
      %419 = vmatpush.msra.mxu0 %v274
      %420 = vmatpush.msra.mxu0 %v273
      %421 = vmatpush.msra.mxu0 %v272
      %422 = vmatpush.msra.mxu0 %v271
      %423 = vmatpush.msra.mxu0 %v270
      %424 = vmatpush.msra.mxu0 %v269
      %425 = vmatmul.f32.gmra.mxu0 %v231
      %v426 = vpop.f32.mrf.mxu0
      %v427 = vadd.f32 %v407, %v426
      %428 = vdwg.mxu0
      %429 = vmatpush.msra.mxu0 %v300
      %430 = vmatpush.msra.mxu0 %v299
      %431 = vmatpush.msra.mxu0 %v298
      %432 = vmatpush.msra.mxu0 %v297
      %433 = vmatpush.msra.mxu0 %v296
      %434 = vmatpush.msra.mxu0 %v295
      %435 = vmatpush.msra.mxu0 %v294
      %436 = vmatpush.msra.mxu0 %v293
      %437 = vmatpush.msra.mxu0 %v292
      %438 = vmatpush.msra.mxu0 %v291
      %439 = vmatpush.msra.mxu0 %v290
      %440 = vmatpush.msra.mxu0 %v289
      %441 = vmatpush.msra.mxu0 %v288
      %442 = vmatpush.msra.mxu0 %v287
      %443 = vmatpush.msra.mxu0 %v286
      %444 = vmatpush.msra.mxu0 %v285
      %445 = vmatmul.f32.gmra.mxu0 %v232
      %v446 = vpop.f32.mrf.mxu0
      %v447 = vadd.f32 %v427, %v446
      %448 = vdwg.mxu0
      %449 = vmatpush.msra.mxu0 %v316
      %450 = vmatpush.msra.mxu0 %v315
      %451 = vmatpush.msra.mxu0 %v314
      %452 = vmatpush.msra.mxu0 %v313
      %453 = vmatpush.msra.mxu0 %v312
      %454 = vmatpush.msra.mxu0 %v311
      %455 = vmatpush.msra.mxu0 %v310
      %456 = vmatpush.msra.mxu0 %v309
      %457 = vmatpush.msra.mxu0 %v308
      %458 = vmatpush.msra.mxu0 %v307
      %459 = vmatpush.msra.mxu0 %v306
      %460 = vmatpush.msra.mxu0 %v305
      %461 = vmatpush.msra.mxu0 %v304
      %462 = vmatpush.msra.mxu0 %v303
      %463 = vmatpush.msra.mxu0 %v302
      %464 = vmatpush.msra.mxu0 %v301
      %465 = vmatmul.f32.gmra.mxu0 %v233
      %v466 = vpop.f32.mrf.mxu0
      %v467 = vadd.f32 %v447, %v466
      %468 = vdwg.mxu0
      %469 = vmatpush.msra.mxu0 %v332
      %470 = vmatpush.msra.mxu0 %v331
      %471 = vmatpush.msra.mxu0 %v330
      %472 = vmatpush.msra.mxu0 %v329
      %473 = vmatpush.msra.mxu0 %v328
      %474 = vmatpush.msra.mxu0 %v327
      %475 = vmatpush.msra.mxu0 %v326
      %476 = vmatpush.msra.mxu0 %v325
      %477 = vmatpush.msra.mxu0 %v324
      %478 = vmatpush.msra.mxu0 %v323
      %479 = vmatpush.msra.mxu0 %v322
      %480 = vmatpush.msra.mxu0 %v321
      %481 = vmatpush.msra.mxu0 %v320
      %482 = vmatpush.msra.mxu0 %v319
      %483 = vmatpush.msra.mxu0 %v318
      %484 = vmatpush.msra.mxu0 %v317
      %485 = vmatmul.f32.gmra.mxu0 %v234
      %v486 = vpop.f32.mrf.mxu0
      %v487 = vadd.f32 %v467, %v486
      %488 = vdwg.mxu0
      %489 = vmatpush.msra.mxu0 %v348
      %490 = vmatpush.msra.mxu0 %v347
      %491 = vmatpush.msra.mxu0 %v346
      %492 = vmatpush.msra.mxu0 %v345
      %493 = vmatpush.msra.mxu0 %v344
      %494 = vmatpush.msra.mxu0 %v343
      %495 = vmatpush.msra.mxu0 %v342
      %496 = vmatpush.msra.mxu0 %v341
      %497 = vmatpush.msra.mxu0 %v340
      %498 = vmatpush.msra.mxu0 %v339
      %499 = vmatpush.msra.mxu0 %v338
      %500 = vmatpush.msra.mxu0 %v337
      %501 = vmatpush.msra.mxu0 %v336
      %502 = vmatpush.msra.mxu0 %v335
      %503 = vmatpush.msra.mxu0 %v334
      %504 = vmatpush.msra.mxu0 %v333
      %505 = vmatmul.f32.gmra.mxu0 %v235
      %v506 = vpop.f32.mrf.mxu0
      %v507 = vadd.f32 %v487, %v506
      %508 = vdwg.mxu0
      %509 = vmatpush.msra.mxu0 %v364
      %510 = vmatpush.msra.mxu0 %v363
      %511 = vmatpush.msra.mxu0 %v362
      %512 = vmatpush.msra.mxu0 %v361
      %513 = vmatpush.msra.mxu0 %v360
      %514 = vmatpush.msra.mxu0 %v359
      %515 = vmatpush.msra.mxu0 %v358
      %516 = vmatpush.msra.mxu0 %v357
      %517 = vmatpush.msra.mxu0 %v356
      %518 = vmatpush.msra.mxu0 %v355
      %519 = vmatpush.msra.mxu0 %v354
      %520 = vmatpush.msra.mxu0 %v353
      %521 = vmatpush.msra.mxu0 %v352
      %522 = vmatpush.msra.mxu0 %v351
      %523 = vmatpush.msra.mxu0 %v350
      %524 = vmatpush.msra.mxu0 %v349
      %525 = vmatmul.f32.gmra.mxu0 %v236
      %v526 = vpop.f32.mrf.mxu0
      %v527 = vadd.f32 %v507, %v526
      %528 = vdwg.mxu0
      %v529 = vtanh.pop %v527
      %530 = vst [vmem:[#allocation3] sm:$0xff] %v529
    $region33: #{tpu_custom_call.1} parent=1 // pred_fallthru
      _
    %v531 = vld [vmem:[#allocation3] sm:$0xff]
    %v532 = vld [vmem:[#allocation10] sm:$0xff]
    %v533 = vld [vmem:[#allocation10 + $0x8] sm:$0xff]
    %v534 = vld [vmem:[#allocation10 + $0x10] sm:$0xff]
    %v535 = vld [vmem:[#allocation10 + $0x18] sm:$0xff]
    %v536 = vld [vmem:[#allocation10 + $0x20] sm:$0xff]
    %v537 = vld [vmem:[#allocation10 + $0x28] sm:$0xff]
    %v538 = vld [vmem:[#allocation10 + $0x30] sm:$0xff]
    %v539 = vld [vmem:[#allocation10 + $0x38] sm:$0xff]
    %v540 = vld [vmem:[#allocation10 + $0x40] sm:$0xff]
    %v541 = vld [vmem:[#allocation10 + $0x48] sm:$0xff]
    %v542 = vld [vmem:[#allocation10 + $0x50] sm:$0xff]
    %v543 = vld [vmem:[#allocation10 + $0x58] sm:$0xff]
    %v544 = vld [vmem:[#allocation10 + $0x60] sm:$0xff]
    %v545 = vld [vmem:[#allocation10 + $0x68] sm:$0xff]
    %v546 = vld [vmem:[#allocation10 + $0x70] sm:$0xff]
    %v547 = vld [vmem:[#allocation10 + $0x78] sm:$0xff]
    %v548 = vld [vmem:[#allocation10 + $0x80] sm:$0xff]
    %v549 = vld [vmem:[#allocation10 + $0x88] sm:$0xff]
    %v550 = vld [vmem:[#allocation10 + $0x90] sm:$0xff]
    %v551 = vld [vmem:[#allocation10 + $0x98] sm:$0xff]
    %v552 = vld [vmem:[#allocation10 + $0xa0] sm:$0xff]
    %v553 = vld [vmem:[#allocation10 + $0xa8] sm:$0xff]
    %v554 = vld [vmem:[#allocation10 + $0xb0] sm:$0xff]
    %v555 = vld [vmem:[#allocation10 + $0xb8] sm:$0xff]
    %v556 = vld [vmem:[#allocation10 + $0xc0] sm:$0xff]
    %v557 = vld [vmem:[#allocation10 + $0xc8] sm:$0xff]
    %v558 = vld [vmem:[#allocation10 + $0xd0] sm:$0xff]
    %v559 = vld [vmem:[#allocation10 + $0xd8] sm:$0xff]
    %v560 = vld [vmem:[#allocation10 + $0xe0] sm:$0xff]
    %v561 = vld [vmem:[#allocation10 + $0xe8] sm:$0xff]
    %v562 = vld [vmem:[#allocation10 + $0xf0] sm:$0xff]
    %v563 = vld [vmem:[#allocation10 + $0xf8] sm:$0xff]
    %v564 = vld [vmem:[#allocation10 + $0x100] sm:$0xff]
    %v565 = vld [vmem:[#allocation10 + $0x108] sm:$0xff]
    %v566 = vld [vmem:[#allocation10 + $0x110] sm:$0xff]
    %v567 = vld [vmem:[#allocation10 + $0x118] sm:$0xff]
    %v568 = vld [vmem:[#allocation10 + $0x120] sm:$0xff]
    %v569 = vld [vmem:[#allocation10 + $0x128] sm:$0xff]
    %v570 = vld [vmem:[#allocation10 + $0x130] sm:$0xff]
    %v571 = vld [vmem:[#allocation10 + $0x138] sm:$0xff]
    %v572 = vld [vmem:[#allocation10 + $0x140] sm:$0xff]
    %v573 = vld [vmem:[#allocation10 + $0x148] sm:$0xff]
    %v574 = vld [vmem:[#allocation10 + $0x150] sm:$0xff]
    %v575 = vld [vmem:[#allocation10 + $0x158] sm:$0xff]
    %v576 = vld [vmem:[#allocation10 + $0x160] sm:$0xff]
    %v577 = vld [vmem:[#allocation10 + $0x168] sm:$0xff]
    %v578 = vld [vmem:[#allocation10 + $0x170] sm:$0xff]
    %v579 = vld [vmem:[#allocation10 + $0x178] sm:$0xff]
    %v580 = vld [vmem:[#allocation10 + $0x180] sm:$0xff]
    %v581 = vld [vmem:[#allocation10 + $0x188] sm:$0xff]
    %v582 = vld [vmem:[#allocation10 + $0x190] sm:$0xff]
    %v583 = vld [vmem:[#allocation10 + $0x198] sm:$0xff]
    %v584 = vld [vmem:[#allocation10 + $0x1a0] sm:$0xff]
    %v585 = vld [vmem:[#allocation10 + $0x1a8] sm:$0xff]
    %v586 = vld [vmem:[#allocation10 + $0x1b0] sm:$0xff]
    %v587 = vld [vmem:[#allocation10 + $0x1b8] sm:$0xff]
    %v588 = vld [vmem:[#allocation10 + $0x1c0] sm:$0xff]
    %v589 = vld [vmem:[#allocation10 + $0x1c8] sm:$0xff]
    %v590 = vld [vmem:[#allocation10 + $0x1d0] sm:$0xff]
    %v591 = vld [vmem:[#allocation10 + $0x1d8] sm:$0xff]
    %v592 = vld [vmem:[#allocation10 + $0x1e0] sm:$0xff]
    %v593 = vld [vmem:[#allocation10 + $0x1e8] sm:$0xff]
    %v594 = vld [vmem:[#allocation10 + $0x1f0] sm:$0xff]
    %v595 = vld [vmem:[#allocation10 + $0x1f8] sm:$0xff]
    %v596 = vld [vmem:[#allocation10 + $0x200] sm:$0xff]
    %v597 = vld [vmem:[#allocation10 + $0x208] sm:$0xff]
    %v598 = vld [vmem:[#allocation10 + $0x210] sm:$0xff]
    %v599 = vld [vmem:[#allocation10 + $0x218] sm:$0xff]
    %v600 = vld [vmem:[#allocation10 + $0x220] sm:$0xff]
    %v601 = vld [vmem:[#allocation10 + $0x228] sm:$0xff]
    %v602 = vld [vmem:[#allocation10 + $0x230] sm:$0xff]
    %v603 = vld [vmem:[#allocation10 + $0x238] sm:$0xff]
    %v604 = vld [vmem:[#allocation10 + $0x240] sm:$0xff]
    %v605 = vld [vmem:[#allocation10 + $0x248] sm:$0xff]
    %v606 = vld [vmem:[#allocation10 + $0x250] sm:$0xff]
    %v607 = vld [vmem:[#allocation10 + $0x258] sm:$0xff]
    %v608 = vld [vmem:[#allocation10 + $0x260] sm:$0xff]
    %v609 = vld [vmem:[#allocation10 + $0x268] sm:$0xff]
    %v610 = vld [vmem:[#allocation10 + $0x270] sm:$0xff]
    %v611 = vld [vmem:[#allocation10 + $0x278] sm:$0xff]
    %v612 = vld [vmem:[#allocation10 + $0x280] sm:$0xff]
    %v613 = vld [vmem:[#allocation10 + $0x288] sm:$0xff]
    %v614 = vld [vmem:[#allocation10 + $0x290] sm:$0xff]
    %v615 = vld [vmem:[#allocation10 + $0x298] sm:$0xff]
    %v616 = vld [vmem:[#allocation10 + $0x2a0] sm:$0xff]
    %v617 = vld [vmem:[#allocation10 + $0x2a8] sm:$0xff]
    %v618 = vld [vmem:[#allocation10 + $0x2b0] sm:$0xff]
    %v619 = vld [vmem:[#allocation10 + $0x2b8] sm:$0xff]
    %v620 = vld [vmem:[#allocation10 + $0x2c0] sm:$0xff]
    %v621 = vld [vmem:[#allocation10 + $0x2c8] sm:$0xff]
    %v622 = vld [vmem:[#allocation10 + $0x2d0] sm:$0xff]
    %v623 = vld [vmem:[#allocation10 + $0x2d8] sm:$0xff]
    %v624 = vld [vmem:[#allocation10 + $0x2e0] sm:$0xff]
    %v625 = vld [vmem:[#allocation10 + $0x2e8] sm:$0xff]
    %v626 = vld [vmem:[#allocation10 + $0x2f0] sm:$0xff]
    %v627 = vld [vmem:[#allocation10 + $0x2f8] sm:$0xff]
    %v628 = vld [vmem:[#allocation10 + $0x300] sm:$0xff]
    %v629 = vld [vmem:[#allocation10 + $0x308] sm:$0xff]
    %v630 = vld [vmem:[#allocation10 + $0x310] sm:$0xff]
    %v631 = vld [vmem:[#allocation10 + $0x318] sm:$0xff]
    %v632 = vld [vmem:[#allocation10 + $0x320] sm:$0xff]
    %v633 = vld [vmem:[#allocation10 + $0x328] sm:$0xff]
    %v634 = vld [vmem:[#allocation10 + $0x330] sm:$0xff]
    %v635 = vld [vmem:[#allocation10 + $0x338] sm:$0xff]
    %v636 = vld [vmem:[#allocation10 + $0x340] sm:$0xff]
    %v637 = vld [vmem:[#allocation10 + $0x348] sm:$0xff]
    %v638 = vld [vmem:[#allocation10 + $0x350] sm:$0xff]
    %v639 = vld [vmem:[#allocation10 + $0x358] sm:$0xff]
    %v640 = vld [vmem:[#allocation10 + $0x360] sm:$0xff]
    %v641 = vld [vmem:[#allocation10 + $0x368] sm:$0xff]
    %v642 = vld [vmem:[#allocation10 + $0x370] sm:$0xff]
    %v643 = vld [vmem:[#allocation10 + $0x378] sm:$0xff]
    %v644 = vld [vmem:[#allocation10 + $0x380] sm:$0xff]
    %v645 = vld [vmem:[#allocation10 + $0x388] sm:$0xff]
    %v646 = vld [vmem:[#allocation10 + $0x390] sm:$0xff]
    %v647 = vld [vmem:[#allocation10 + $0x398] sm:$0xff]
    %v648 = vld [vmem:[#allocation10 + $0x3a0] sm:$0xff]
    %v649 = vld [vmem:[#allocation10 + $0x3a8] sm:$0xff]
    %v650 = vld [vmem:[#allocation10 + $0x3b0] sm:$0xff]
    %v651 = vld [vmem:[#allocation10 + $0x3b8] sm:$0xff]
    %v652 = vld [vmem:[#allocation10 + $0x3c0] sm:$0xff]
    %v653 = vld [vmem:[#allocation10 + $0x3c8] sm:$0xff]
    %v654 = vld [vmem:[#allocation10 + $0x3d0] sm:$0xff]
    %v655 = vld [vmem:[#allocation10 + $0x3d8] sm:$0xff]
    %v656 = vld [vmem:[#allocation10 + $0x3e0] sm:$0xff]
    %v657 = vld [vmem:[#allocation10 + $0x3e8] sm:$0xff]
    %v658 = vld [vmem:[#allocation10 + $0x3f0] sm:$0xff]
    %v659 = vld [vmem:[#allocation10 + $0x3f8] sm:$0xff]
    %v660 = vld [vmem:[#allocation12] sm:$0xff]
    %v662 = vperm.slane %v660, 0
    %v663 = vperm.slane %v660, 1
    %v664 = vperm.slane %v660, 2
    %v665 = vperm.slane %v660, 3
    %v666 = vperm.slane %v660, 4
    %v667 = vperm.slane %v660, 5
    %v668 = vperm.slane %v660, 6
    %v669 = vperm.slane %v660, 7
    %678 = vmatpush.msra.mxu0 %v652
    %679 = vmatpush.msra.mxu0 %v644
    %680 = vmatpush.msra.mxu0 %v636
    %681 = vmatpush.msra.mxu0 %v628
    %682 = vmatpush.msra.mxu0 %v620
    %683 = vmatpush.msra.mxu0 %v612
    %684 = vmatpush.msra.mxu0 %v604
    %685 = vmatpush.msra.mxu0 %v596
    %686 = vmatpush.msra.mxu0 %v588
    %687 = vmatpush.msra.mxu0 %v580
    %688 = vmatpush.msra.mxu0 %v572
    %689 = vmatpush.msra.mxu0 %v564
    %690 = vmatpush.msra.mxu0 %v556
    %691 = vmatpush.msra.mxu0 %v548
    %692 = vmatpush.msra.mxu0 %v540
    %693 = vmatpush.msra.mxu0 %v532
    %694 = vmatmul.f32.gmra.mxu0 %v531
    %v695 = vpop.f32.mrf.mxu0
    %v696 = vadd.f32 %v662, %v695
    %697 = vdwg.mxu0
    %698 = vmatpush.msra.mxu0 %v653
    %699 = vmatpush.msra.mxu0 %v645
    %700 = vmatpush.msra.mxu0 %v637
    %701 = vmatpush.msra.mxu0 %v629
    %702 = vmatpush.msra.mxu0 %v621
    %703 = vmatpush.msra.mxu0 %v613
    %704 = vmatpush.msra.mxu0 %v605
    %705 = vmatpush.msra.mxu0 %v597
    %706 = vmatpush.msra.mxu0 %v589
    %707 = vmatpush.msra.mxu0 %v581
    %708 = vmatpush.msra.mxu0 %v573
    %709 = vmatpush.msra.mxu0 %v565
    %710 = vmatpush.msra.mxu0 %v557
    %711 = vmatpush.msra.mxu0 %v549
    %712 = vmatpush.msra.mxu0 %v541
    %713 = vmatpush.msra.mxu0 %v533
    %714 = vmatmul.f32.gmra.mxu0 %v531
    %v715 = vpop.f32.mrf.mxu0
    %v716 = vadd.f32 %v663, %v715
    %717 = vdwg.mxu0
    %718 = vmatpush.msra.mxu0 %v654
    %719 = vmatpush.msra.mxu0 %v646
    %720 = vmatpush.msra.mxu0 %v638
    %721 = vmatpush.msra.mxu0 %v630
    %722 = vmatpush.msra.mxu0 %v622
    %723 = vmatpush.msra.mxu0 %v614
    %724 = vmatpush.msra.mxu0 %v606
    %725 = vmatpush.msra.mxu0 %v598
    %726 = vmatpush.msra.mxu0 %v590
    %727 = vmatpush.msra.mxu0 %v582
    %728 = vmatpush.msra.mxu0 %v574
    %729 = vmatpush.msra.mxu0 %v566
    %730 = vmatpush.msra.mxu0 %v558
    %731 = vmatpush.msra.mxu0 %v550
    %732 = vmatpush.msra.mxu0 %v542
    %733 = vmatpush.msra.mxu0 %v534
    %734 = vmatmul.f32.gmra.mxu0 %v531
    %v735 = vpop.f32.mrf.mxu0
    %v736 = vadd.f32 %v664, %v735
    %737 = vdwg.mxu0
    %738 = vmatpush.msra.mxu0 %v655
    %739 = vmatpush.msra.mxu0 %v647
    %740 = vmatpush.msra.mxu0 %v639
    %741 = vmatpush.msra.mxu0 %v631
    %742 = vmatpush.msra.mxu0 %v623
    %743 = vmatpush.msra.mxu0 %v615
    %744 = vmatpush.msra.mxu0 %v607
    %745 = vmatpush.msra.mxu0 %v599
    %746 = vmatpush.msra.mxu0 %v591
    %747 = vmatpush.msra.mxu0 %v583
    %748 = vmatpush.msra.mxu0 %v575
    %749 = vmatpush.msra.mxu0 %v567
    %750 = vmatpush.msra.mxu0 %v559
    %751 = vmatpush.msra.mxu0 %v551
    %752 = vmatpush.msra.mxu0 %v543
    %753 = vmatpush.msra.mxu0 %v535
    %754 = vmatmul.f32.gmra.mxu0 %v531
    %v755 = vpop.f32.mrf.mxu0
    %v756 = vadd.f32 %v665, %v755
    %757 = vdwg.mxu0
    %758 = vmatpush.msra.mxu0 %v656
    %759 = vmatpush.msra.mxu0 %v648
    %760 = vmatpush.msra.mxu0 %v640
    %761 = vmatpush.msra.mxu0 %v632
    %762 = vmatpush.msra.mxu0 %v624
    %763 = vmatpush.msra.mxu0 %v616
    %764 = vmatpush.msra.mxu0 %v608
    %765 = vmatpush.msra.mxu0 %v600
    %766 = vmatpush.msra.mxu0 %v592
    %767 = vmatpush.msra.mxu0 %v584
    %768 = vmatpush.msra.mxu0 %v576
    %769 = vmatpush.msra.mxu0 %v568
    %770 = vmatpush.msra.mxu0 %v560
    %771 = vmatpush.msra.mxu0 %v552
    %772 = vmatpush.msra.mxu0 %v544
    %773 = vmatpush.msra.mxu0 %v536
    %774 = vmatmul.f32.gmra.mxu0 %v531
    %v775 = vpop.f32.mrf.mxu0
    %v776 = vadd.f32 %v666, %v775
    %777 = vdwg.mxu0
    %778 = vmatpush.msra.mxu0 %v657
    %779 = vmatpush.msra.mxu0 %v649
    %780 = vmatpush.msra.mxu0 %v641
    %781 = vmatpush.msra.mxu0 %v633
    %782 = vmatpush.msra.mxu0 %v625
    %783 = vmatpush.msra.mxu0 %v617
    %784 = vmatpush.msra.mxu0 %v609
    %785 = vmatpush.msra.mxu0 %v601
    %786 = vmatpush.msra.mxu0 %v593
    %787 = vmatpush.msra.mxu0 %v585
    %788 = vmatpush.msra.mxu0 %v577
    %789 = vmatpush.msra.mxu0 %v569
    %790 = vmatpush.msra.mxu0 %v561
    %791 = vmatpush.msra.mxu0 %v553
    %792 = vmatpush.msra.mxu0 %v545
    %793 = vmatpush.msra.mxu0 %v537
    %794 = vmatmul.f32.gmra.mxu0 %v531
    %v795 = vpop.f32.mrf.mxu0
    %v796 = vadd.f32 %v667, %v795
    %797 = vdwg.mxu0
    %798 = vmatpush.msra.mxu0 %v658
    %799 = vmatpush.msra.mxu0 %v650
    %800 = vmatpush.msra.mxu0 %v642
    %801 = vmatpush.msra.mxu0 %v634
    %802 = vmatpush.msra.mxu0 %v626
    %803 = vmatpush.msra.mxu0 %v618
    %804 = vmatpush.msra.mxu0 %v610
    %805 = vmatpush.msra.mxu0 %v602
    %806 = vmatpush.msra.mxu0 %v594
    %807 = vmatpush.msra.mxu0 %v586
    %808 = vmatpush.msra.mxu0 %v578
    %809 = vmatpush.msra.mxu0 %v570
    %810 = vmatpush.msra.mxu0 %v562
    %811 = vmatpush.msra.mxu0 %v554
    %812 = vmatpush.msra.mxu0 %v546
    %813 = vmatpush.msra.mxu0 %v538
    %814 = vmatmul.f32.gmra.mxu0 %v531
    %v815 = vpop.f32.mrf.mxu0
    %v816 = vadd.f32 %v668, %v815
    %817 = vdwg.mxu0
    %818 = vmatpush.msra.mxu0 %v659
    %819 = vmatpush.msra.mxu0 %v651
    %820 = vmatpush.msra.mxu0 %v643
    %821 = vmatpush.msra.mxu0 %v635
    %822 = vmatpush.msra.mxu0 %v627
    %823 = vmatpush.msra.mxu0 %v619
    %824 = vmatpush.msra.mxu0 %v611
    %825 = vmatpush.msra.mxu0 %v603
    %826 = vmatpush.msra.mxu0 %v595
    %827 = vmatpush.msra.mxu0 %v587
    %828 = vmatpush.msra.mxu0 %v579
    %829 = vmatpush.msra.mxu0 %v571
    %830 = vmatpush.msra.mxu0 %v563
    %831 = vmatpush.msra.mxu0 %v555
    %832 = vmatpush.msra.mxu0 %v547
    %833 = vmatpush.msra.mxu0 %v539
    %834 = vmatmul.f32.gmra.mxu0 %v531
    %v835 = vpop.f32.mrf.mxu0
    %v836 = vadd.f32 %v669, %v835
    %837 = vdwg.mxu0
    %838 = vst [vmem:[#allocation13] sm:$0xff] %v696
    %839 = vst [vmem:[#allocation13 + $0x8] sm:$0xff] %v716
    %840 = vst [vmem:[#allocation13 + $0x10] sm:$0xff] %v736
    %841 = vst [vmem:[#allocation13 + $0x18] sm:$0xff] %v756
    %842 = vst [vmem:[#allocation13 + $0x20] sm:$0xff] %v776
    %843 = vst [vmem:[#allocation13 + $0x28] sm:$0xff] %v796
    %844 = vst [vmem:[#allocation13 + $0x30] sm:$0xff] %v816
    %845 = vst [vmem:[#allocation13 + $0x38] sm:$0xff] %v836
    // Predicated region
    $region66: #{tpu_custom_call.1} parent=1 // pred_check
      _
    $region67: #{tpu_custom_call.1} parent=1 // pred_check_branch
      %847 = sbr.rel (0) target = $region69
    $region68: #{tpu_custom_call.1} parent=1 // pred_region
      %849 = vsyncadd [#allocation9], 0
      %s851 = sshll.u32 [#allocation13], 4
      %s852 = int_to_ptr.vmem [resolvable:$true] %s851
      %s853 = sshll.u32 %s6, 4
      %s854 = int_to_ptr.hbm [resolvable:$true] %s853
      %856 = dma.vmem_to_hbm [thread:$0]  %s852, 1024, %s854, [#allocation9]
    $region69: #{tpu_custom_call.1} parent=1 // pred_fallthru
      _
    // Predicated region
    $region70: #{tpu_custom_call.1} parent=1 // pred_check
      _
    $region71: #{tpu_custom_call.1} parent=1 // pred_check_branch
      %858 = sbr.rel (0) target = $region73
    $region72: #{tpu_custom_call.1} parent=1 // pred_region
      %860 = dma.done [#allocation9], 1024
    $region73: #{tpu_custom_call.1} parent=1 // pred_fallthru
      _
    %861 = vsyncpa [#allocation8], 1
    %862 = vsyncpa [#allocation11], 1
    %863 = vsyncpa [#allocation9], 1
  %864 = vsyncmov [#allocation4]
  %s865 = vpop.sfrf %864
  %p866 = scmp.eq.s32.totalorder %s865, 0
  %p867 = pneg %p866
  %869 = shalt.err (%p867)

</llo_original>
